<compile_context>
chip_gen: v7x
topology: tpu7x:2x2x1
jax: 0.10.0
libtpu: 0.0.40
codegen_flags: <defaults>
</compile_context>

<pallas_src>
import jax
import jax.numpy as jnp
import numpy as np
from jax.experimental import pallas as pl
from jax.experimental.pallas import tpu as pltpu


def gru_rnn_kernel(gi_r_ref, gi_z_ref, gi_n_ref, h0_ref,
                   w_hr_ref, w_hz_ref, w_hn_ref, b_hn_ref,
                   w_dec_ref, b_dec_ref, out_ref, hfin_ref):
    """GRU recurrence (input projection pre-folded) + final Linear decode.

    gi_r_ref/gi_z_ref/gi_n_ref: (S, B, H) precomputed per-token gate inputs,
        with b_ih (all gates) and b_hh (r,z gates) already folded in.
    h0_ref:   (B, H)  initial hidden state (layer 0)
    w_h*_ref: (H, H)  hidden->gate weight blocks (transposed vs. PyTorch)
    b_hn_ref: (1, H)  hidden bias of the n gate (must stay inside r*(...))
    w_dec_ref:(H, O)  decoder weight (transposed vs. PyTorch)
    b_dec_ref:(1, O)  decoder bias
    out_ref:  (B, O)  decoder(last GRU output)
    hfin_ref: (B, H)  final hidden state
    """
    S = gi_r_ref.shape[0]
    B, H = h0_ref.shape

    # Hoist everything loop-invariant out of the recurrence.
    w_hr = w_hr_ref[...]
    w_hz = w_hz_ref[...]
    w_hn = w_hn_ref[...]
    b_hn = jnp.broadcast_to(b_hn_ref[...], (B, H))

    h = h0_ref[...]
    # Fully unrolled time loop (S is a small static constant) -> scheduler can
    # overlap MXU push/pop of adjacent steps; only the h dependence is serial.
    for t in range(S):
        h_r = jnp.dot(h, w_hr, preferred_element_type=jnp.float32)
        h_z = jnp.dot(h, w_hz, preferred_element_type=jnp.float32)
        h_n = jnp.dot(h, w_hn, preferred_element_type=jnp.float32)
        r = jax.nn.sigmoid(gi_r_ref[t] + h_r)
        z = jax.nn.sigmoid(gi_z_ref[t] + h_z)
        n = jnp.tanh(gi_n_ref[t] + r * (h_n + b_hn))
        h = (1.0 - z) * n + z * h

    hfin_ref[...] = h
    # decoder applied to output[:, -1] == last-step hidden (1 layer, unidir.)
    out_ref[...] = jnp.dot(h, w_dec_ref[...],
                           preferred_element_type=jnp.float32) + b_dec_ref[...]


def init_params(key, input_size, hidden_size, output_size):
    """Deterministic synthetic parameters (PyTorch-like uniform init)."""
    ks = jax.random.split(key, 7)
    bound = 1.0 / jnp.sqrt(jnp.float32(hidden_size))
    u = lambda k, shape: jax.random.uniform(k, shape, jnp.float32, -bound, bound)
    return {
        "embedding": jax.random.normal(ks[0], (input_size, hidden_size),
                                       jnp.float32),           # nn.Embedding weight
        "w_ih": u(ks[1], (hidden_size, 3 * hidden_size)),        # W_ih^T
        "w_hh": u(ks[2], (hidden_size, 3 * hidden_size)),        # W_hh^T
        "b_ih": u(ks[3], (1, 3 * hidden_size)),
        "b_hh": u(ks[4], (1, 3 * hidden_size)),
        "w_dec": u(ks[5], (hidden_size, output_size)),           # Linear weight^T
        "b_dec": u(ks[6], (1, output_size)),
    }


@jax.jit
def gru_rnn_forward(inp, hidden, params):
    """inp: (B, S) int32 token ids; hidden: (n_layers=1, B, H) float32."""
    emb = params["embedding"]                 # (V, H)
    w_ih = params["w_ih"]                     # (H, 3H)
    b_ih = params["b_ih"]                     # (1, 3H)
    b_hh = params["b_hh"]                     # (1, 3H)
    H = emb.shape[1]

    # Fold the whole input projection into a per-token table: (V, 3H).
    # r,z gates also absorb their hidden bias (commutes); n gate cannot.
    gi_table = emb @ w_ih + b_ih
    gi_table = gi_table.at[:, 0:2 * H].add(b_hh[:, 0:2 * H])

    # Gather per token directly in time-major order: (S, B, 3H).
    gi_all = jnp.take(gi_table, inp.T, axis=0)
    gi_r = gi_all[:, :, 0:H]
    gi_z = gi_all[:, :, H:2 * H]
    gi_n = gi_all[:, :, 2 * H:3 * H]

    w_hh = params["w_hh"]                     # (H, 3H) -> three (H, H) blocks
    w_hr = w_hh[:, 0:H]
    w_hz = w_hh[:, H:2 * H]
    w_hn = w_hh[:, 2 * H:3 * H]
    b_hn = b_hh[:, 2 * H:3 * H]

    h0 = hidden[0]                            # (B, H)
    B = h0.shape[0]
    O = params["b_dec"].shape[-1]

    vmem = pl.BlockSpec(memory_space=pltpu.MemorySpace.VMEM)
    out, h_fin = pl.pallas_call(
        gru_rnn_kernel,
        out_shape=(jax.ShapeDtypeStruct((B, O), jnp.float32),
                   jax.ShapeDtypeStruct((B, H), jnp.float32)),
        in_specs=[vmem] * 10,
        out_specs=(vmem, vmem),
    )(gi_r, gi_z, gi_n, h0, w_hr, w_hz, w_hn, b_hn,
      params["w_dec"], params["b_dec"])

    # Match PyTorch return: (decoder(output[:, -1]), hidden (n_layers, B, H))
    return out, h_fin[None, :, :]


def _reference_forward(inp, hidden, params):
    """Pure-JAX reference matching torch.nn.GRU gate math (for self-check)."""
    emb = jnp.take(params["embedding"], inp, axis=0)     # (B, S, H)
    H = params["embedding"].shape[1]
    b_ih, b_hh = params["b_ih"][0], params["b_hh"][0]
    w_ih, w_hh = params["w_ih"], params["w_hh"]
    h = hidden[0]
    for t in range(inp.shape[1]):
        x_t = emb[:, t]
        gi = x_t @ w_ih + b_ih
        gh = h @ w_hh + b_hh
        r = jax.nn.sigmoid(gi[:, 0:H] + gh[:, 0:H])
        z = jax.nn.sigmoid(gi[:, H:2 * H] + gh[:, H:2 * H])
        n = jnp.tanh(gi[:, 2 * H:] + r * gh[:, 2 * H:])
        h = (1.0 - z) * n + z * h
    out = h @ params["w_dec"] + params["b_dec"]
    return out, h[None]


if __name__ == "__main__":
    input_size = 16     # vocab size for nn.Embedding
    hidden_size = 32
    output_size = 10
    n_layers = 1
    batch = 2
    seq = 8

    key = jax.random.PRNGKey(0)
    k_param, k_inp = jax.random.split(key)

    params = init_params(k_param, input_size, hidden_size, output_size)
    inp = jax.random.randint(k_inp, (batch, seq), 0, input_size, dtype=jnp.int32)
    hidden = jnp.zeros((n_layers, batch, hidden_size), jnp.float32)  # init_hidden

    out, h_new = gru_rnn_forward(inp, hidden, params)
    jax.block_until_ready((out, h_new))

    assert out.shape == (batch, output_size)
    assert h_new.shape == (n_layers, batch, hidden_size)

    # Lightweight numerical self-check against a pure-JAX reference.
    ref_out, ref_h = _reference_forward(inp, hidden, params)
    np.testing.assert_allclose(np.asarray(out), np.asarray(ref_out),
                               rtol=1e-4, atol=1e-4)
    np.testing.assert_allclose(np.asarray(h_new), np.asarray(ref_h),
                               rtol=1e-4, atol=1e-4)

    print("KERNEL_OK")
</pallas_src>

<mosaic_0001>
module attributes {stable_mosaic.version = 11 : i64} {
  func.func @gru_rnn_kernel(%arg0: memref<8x2x32xf32, #tpu.memory_space<vmem>>, %arg1: memref<8x2x32xf32, #tpu.memory_space<vmem>>, %arg2: memref<8x2x32xf32, #tpu.memory_space<vmem>>, %arg3: memref<2x32xf32, #tpu.memory_space<vmem>>, %arg4: memref<32x32xf32, #tpu.memory_space<vmem>>, %arg5: memref<32x32xf32, #tpu.memory_space<vmem>>, %arg6: memref<32x32xf32, #tpu.memory_space<vmem>>, %arg7: memref<1x32xf32, #tpu.memory_space<vmem>>, %arg8: memref<32x10xf32, #tpu.memory_space<vmem>>, %arg9: memref<1x10xf32, #tpu.memory_space<vmem>>, %arg10: memref<2x10xf32, #tpu.memory_space<vmem>>, %arg11: memref<2x32xf32, #tpu.memory_space<vmem>>) attributes {dimension_semantics = [], scalar_prefetch = 0 : i64, scratch_operands = 0 : i64, tpu.core_type = #tpu.core_type<tc>} {
    %c0 = arith.constant 0 : index
    %c0_0 = arith.constant 0 : index
    %0 = vector.load %arg4[%c0, %c0_0] : memref<32x32xf32, #tpu.memory_space<vmem>>, vector<32x32xf32>
    %c0_1 = arith.constant 0 : index
    %c0_2 = arith.constant 0 : index
    %1 = vector.load %arg5[%c0_1, %c0_2] : memref<32x32xf32, #tpu.memory_space<vmem>>, vector<32x32xf32>
    %c0_3 = arith.constant 0 : index
    %c0_4 = arith.constant 0 : index
    %2 = vector.load %arg6[%c0_3, %c0_4] : memref<32x32xf32, #tpu.memory_space<vmem>>, vector<32x32xf32>
    %c0_5 = arith.constant 0 : index
    %c0_6 = arith.constant 0 : index
    %3 = vector.load %arg7[%c0_5, %c0_6] : memref<1x32xf32, #tpu.memory_space<vmem>>, vector<1x32xf32>
    %4 = vector.shape_cast %3 : vector<1x32xf32> to vector<1x32xf32>
    %5 = vector.broadcast %4 : vector<1x32xf32> to vector<2x32xf32>
    %c0_7 = arith.constant 0 : index
    %c0_8 = arith.constant 0 : index
    %6 = vector.load %arg3[%c0_7, %c0_8] : memref<2x32xf32, #tpu.memory_space<vmem>>, vector<2x32xf32>
    %cst = arith.constant dense<0.000000e+00> : vector<2x32xf32>
    %7 = tpu.matmul %6, %0, %cst {dimension_numbers = #tpu.dot_dimension_numbers<[1], [0], [0], [1], [0, 0, 1, 1], [], []>} : vector<2x32xf32>, vector<32x32xf32>, vector<2x32xf32> -> vector<2x32xf32>
    %cst_9 = arith.constant dense<0.000000e+00> : vector<2x32xf32>
    %8 = tpu.matmul %6, %1, %cst_9 {dimension_numbers = #tpu.dot_dimension_numbers<[1], [0], [0], [1], [0, 0, 1, 1], [], []>} : vector<2x32xf32>, vector<32x32xf32>, vector<2x32xf32> -> vector<2x32xf32>
    %cst_10 = arith.constant dense<0.000000e+00> : vector<2x32xf32>
    %9 = tpu.matmul %6, %2, %cst_10 {dimension_numbers = #tpu.dot_dimension_numbers<[1], [0], [0], [1], [0, 0, 1, 1], [], []>} : vector<2x32xf32>, vector<32x32xf32>, vector<2x32xf32> -> vector<2x32xf32>
    %c0_11 = arith.constant 0 : index
    %c0_12 = arith.constant 0 : index
    %c0_13 = arith.constant 0 : index
    %10 = vector.load %arg0[%c0_11, %c0_12, %c0_13] : memref<8x2x32xf32, #tpu.memory_space<vmem>>, vector<1x2x32xf32>
    %11 = vector.shape_cast %10 : vector<1x2x32xf32> to vector<2x32xf32>
    %12 = arith.addf %11, %7 : vector<2x32xf32>
    %13 = arith.negf %12 : vector<2x32xf32>
    %14 = math.exp %13 : vector<2x32xf32>
    %cst_14 = arith.constant 1.000000e+00 : f32
    %15 = vector.broadcast %cst_14 : f32 to vector<2x32xf32>
    %16 = arith.addf %15, %14 : vector<2x32xf32>
    %17 = arith.divf %15, %16 : vector<2x32xf32>
    %c0_15 = arith.constant 0 : index
    %c0_16 = arith.constant 0 : index
    %c0_17 = arith.constant 0 : index
    %18 = vector.load %arg1[%c0_15, %c0_16, %c0_17] : memref<8x2x32xf32, #tpu.memory_space<vmem>>, vector<1x2x32xf32>
    %19 = vector.shape_cast %18 : vector<1x2x32xf32> to vector<2x32xf32>
    %20 = arith.addf %19, %8 : vector<2x32xf32>
    %21 = arith.negf %20 : vector<2x32xf32>
    %22 = math.exp %21 : vector<2x32xf32>
    %cst_18 = arith.constant 1.000000e+00 : f32
    %23 = vector.broadcast %cst_18 : f32 to vector<2x32xf32>
    %24 = arith.addf %23, %22 : vector<2x32xf32>
    %25 = arith.divf %23, %24 : vector<2x32xf32>
    %c0_19 = arith.constant 0 : index
    %c0_20 = arith.constant 0 : index
    %c0_21 = arith.constant 0 : index
    %26 = vector.load %arg2[%c0_19, %c0_20, %c0_21] : memref<8x2x32xf32, #tpu.memory_space<vmem>>, vector<1x2x32xf32>
    %27 = vector.shape_cast %26 : vector<1x2x32xf32> to vector<2x32xf32>
    %28 = arith.addf %9, %5 : vector<2x32xf32>
    %29 = arith.mulf %17, %28 : vector<2x32xf32>
    %30 = arith.addf %27, %29 : vector<2x32xf32>
    %31 = math.tanh %30 : vector<2x32xf32>
    %cst_22 = arith.constant 1.000000e+00 : f32
    %32 = vector.broadcast %cst_22 : f32 to vector<2x32xf32>
    %33 = arith.subf %32, %25 : vector<2x32xf32>
    %34 = arith.mulf %33, %31 : vector<2x32xf32>
    %35 = arith.mulf %25, %6 : vector<2x32xf32>
    %36 = arith.addf %34, %35 : vector<2x32xf32>
    %cst_23 = arith.constant dense<0.000000e+00> : vector<2x32xf32>
    %37 = tpu.matmul %36, %0, %cst_23 {dimension_numbers = #tpu.dot_dimension_numbers<[1], [0], [0], [1], [0, 0, 1, 1], [], []>} : vector<2x32xf32>, vector<32x32xf32>, vector<2x32xf32> -> vector<2x32xf32>
    %cst_24 = arith.constant dense<0.000000e+00> : vector<2x32xf32>
    %38 = tpu.matmul %36, %1, %cst_24 {dimension_numbers = #tpu.dot_dimension_numbers<[1], [0], [0], [1], [0, 0, 1, 1], [], []>} : vector<2x32xf32>, vector<32x32xf32>, vector<2x32xf32> -> vector<2x32xf32>
    %cst_25 = arith.constant dense<0.000000e+00> : vector<2x32xf32>
    %39 = tpu.matmul %36, %2, %cst_25 {dimension_numbers = #tpu.dot_dimension_numbers<[1], [0], [0], [1], [0, 0, 1, 1], [], []>} : vector<2x32xf32>, vector<32x32xf32>, vector<2x32xf32> -> vector<2x32xf32>
    %c1 = arith.constant 1 : index
    %c0_26 = arith.constant 0 : index
    %c0_27 = arith.constant 0 : index
    %40 = vector.load %arg0[%c1, %c0_26, %c0_27] : memref<8x2x32xf32, #tpu.memory_space<vmem>>, vector<1x2x32xf32>
    %41 = vector.shape_cast %40 : vector<1x2x32xf32> to vector<2x32xf32>
    %42 = arith.addf %41, %37 : vector<2x32xf32>
    %43 = arith.negf %42 : vector<2x32xf32>
    %44 = math.exp %43 : vector<2x32xf32>
    %cst_28 = arith.constant 1.000000e+00 : f32
    %45 = vector.broadcast %cst_28 : f32 to vector<2x32xf32>
    %46 = arith.addf %45, %44 : vector<2x32xf32>
    %47 = arith.divf %45, %46 : vector<2x32xf32>
    %c1_29 = arith.constant 1 : index
    %c0_30 = arith.constant 0 : index
    %c0_31 = arith.constant 0 : index
    %48 = vector.load %arg1[%c1_29, %c0_30, %c0_31] : memref<8x2x32xf32, #tpu.memory_space<vmem>>, vector<1x2x32xf32>
    %49 = vector.shape_cast %48 : vector<1x2x32xf32> to vector<2x32xf32>
    %50 = arith.addf %49, %38 : vector<2x32xf32>
    %51 = arith.negf %50 : vector<2x32xf32>
    %52 = math.exp %51 : vector<2x32xf32>
    %cst_32 = arith.constant 1.000000e+00 : f32
    %53 = vector.broadcast %cst_32 : f32 to vector<2x32xf32>
    %54 = arith.addf %53, %52 : vector<2x32xf32>
    %55 = arith.divf %53, %54 : vector<2x32xf32>
    %c1_33 = arith.constant 1 : index
    %c0_34 = arith.constant 0 : index
    %c0_35 = arith.constant 0 : index
    %56 = vector.load %arg2[%c1_33, %c0_34, %c0_35] : memref<8x2x32xf32, #tpu.memory_space<vmem>>, vector<1x2x32xf32>
    %57 = vector.shape_cast %56 : vector<1x2x32xf32> to vector<2x32xf32>
    %58 = arith.addf %39, %5 : vector<2x32xf32>
    %59 = arith.mulf %47, %58 : vector<2x32xf32>
    %60 = arith.addf %57, %59 : vector<2x32xf32>
    %61 = math.tanh %60 : vector<2x32xf32>
    %cst_36 = arith.constant 1.000000e+00 : f32
    %62 = vector.broadcast %cst_36 : f32 to vector<2x32xf32>
    %63 = arith.subf %62, %55 : vector<2x32xf32>
    %64 = arith.mulf %63, %61 : vector<2x32xf32>
    %65 = arith.mulf %55, %36 : vector<2x32xf32>
    %66 = arith.addf %64, %65 : vector<2x32xf32>
    %cst_37 = arith.constant dense<0.000000e+00> : vector<2x32xf32>
    %67 = tpu.matmul %66, %0, %cst_37 {dimension_numbers = #tpu.dot_dimension_numbers<[1], [0], [0], [1], [0, 0, 1, 1], [], []>} : vector<2x32xf32>, vector<32x32xf32>, vector<2x32xf32> -> vector<2x32xf32>
    %cst_38 = arith.constant dense<0.000000e+00> : vector<2x32xf32>
    %68 = tpu.matmul %66, %1, %cst_38 {dimension_numbers = #tpu.dot_dimension_numbers<[1], [0], [0], [1], [0, 0, 1, 1], [], []>} : vector<2x32xf32>, vector<32x32xf32>, vector<2x32xf32> -> vector<2x32xf32>
    %cst_39 = arith.constant dense<0.000000e+00> : vector<2x32xf32>
    %69 = tpu.matmul %66, %2, %cst_39 {dimension_numbers = #tpu.dot_dimension_numbers<[1], [0], [0], [1], [0, 0, 1, 1], [], []>} : vector<2x32xf32>, vector<32x32xf32>, vector<2x32xf32> -> vector<2x32xf32>
    %c2 = arith.constant 2 : index
    %c0_40 = arith.constant 0 : index
    %c0_41 = arith.constant 0 : index
    %70 = vector.load %arg0[%c2, %c0_40, %c0_41] : memref<8x2x32xf32, #tpu.memory_space<vmem>>, vector<1x2x32xf32>
    %71 = vector.shape_cast %70 : vector<1x2x32xf32> to vector<2x32xf32>
    %72 = arith.addf %71, %67 : vector<2x32xf32>
    %73 = arith.negf %72 : vector<2x32xf32>
    %74 = math.exp %73 : vector<2x32xf32>
    %cst_42 = arith.constant 1.000000e+00 : f32
    %75 = vector.broadcast %cst_42 : f32 to vector<2x32xf32>
    %76 = arith.addf %75, %74 : vector<2x32xf32>
    %77 = arith.divf %75, %76 : vector<2x32xf32>
    %c2_43 = arith.constant 2 : index
    %c0_44 = arith.constant 0 : index
    %c0_45 = arith.constant 0 : index
    %78 = vector.load %arg1[%c2_43, %c0_44, %c0_45] : memref<8x2x32xf32, #tpu.memory_space<vmem>>, vector<1x2x32xf32>
    %79 = vector.shape_cast %78 : vector<1x2x32xf32> to vector<2x32xf32>
    %80 = arith.addf %79, %68 : vector<2x32xf32>
    %81 = arith.negf %80 : vector<2x32xf32>
    %82 = math.exp %81 : vector<2x32xf32>
    %cst_46 = arith.constant 1.000000e+00 : f32
    %83 = vector.broadcast %cst_46 : f32 to vector<2x32xf32>
    %84 = arith.addf %83, %82 : vector<2x32xf32>
    %85 = arith.divf %83, %84 : vector<2x32xf32>
    %c2_47 = arith.constant 2 : index
    %c0_48 = arith.constant 0 : index
    %c0_49 = arith.constant 0 : index
    %86 = vector.load %arg2[%c2_47, %c0_48, %c0_49] : memref<8x2x32xf32, #tpu.memory_space<vmem>>, vector<1x2x32xf32>
    %87 = vector.shape_cast %86 : vector<1x2x32xf32> to vector<2x32xf32>
    %88 = arith.addf %69, %5 : vector<2x32xf32>
    %89 = arith.mulf %77, %88 : vector<2x32xf32>
    %90 = arith.addf %87, %89 : vector<2x32xf32>
    %91 = math.tanh %90 : vector<2x32xf32>
    %cst_50 = arith.constant 1.000000e+00 : f32
    %92 = vector.broadcast %cst_50 : f32 to vector<2x32xf32>
    %93 = arith.subf %92, %85 : vector<2x32xf32>
    %94 = arith.mulf %93, %91 : vector<2x32xf32>
    %95 = arith.mulf %85, %66 : vector<2x32xf32>
    %96 = arith.addf %94, %95 : vector<2x32xf32>
    %cst_51 = arith.constant dense<0.000000e+00> : vector<2x32xf32>
    %97 = tpu.matmul %96, %0, %cst_51 {dimension_numbers = #tpu.dot_dimension_numbers<[1], [0], [0], [1], [0, 0, 1, 1], [], []>} : vector<2x32xf32>, vector<32x32xf32>, vector<2x32xf32> -> vector<2x32xf32>
    %cst_52 = arith.constant dense<0.000000e+00> : vector<2x32xf32>
    %98 = tpu.matmul %96, %1, %cst_52 {dimension_numbers = #tpu.dot_dimension_numbers<[1], [0], [0], [1], [0, 0, 1, 1], [], []>} : vector<2x32xf32>, vector<32x32xf32>, vector<2x32xf32> -> vector<2x32xf32>
    %cst_53 = arith.constant dense<0.000000e+00> : vector<2x32xf32>
    %99 = tpu.matmul %96, %2, %cst_53 {dimension_numbers = #tpu.dot_dimension_numbers<[1], [0], [0], [1], [0, 0, 1, 1], [], []>} : vector<2x32xf32>, vector<32x32xf32>, vector<2x32xf32> -> vector<2x32xf32>
    %c3 = arith.constant 3 : index
    %c0_54 = arith.constant 0 : index
    %c0_55 = arith.constant 0 : index
    %100 = vector.load %arg0[%c3, %c0_54, %c0_55] : memref<8x2x32xf32, #tpu.memory_space<vmem>>, vector<1x2x32xf32>
    %101 = vector.shape_cast %100 : vector<1x2x32xf32> to vector<2x32xf32>
    %102 = arith.addf %101, %97 : vector<2x32xf32>
    %103 = arith.negf %102 : vector<2x32xf32>
    %104 = math.exp %103 : vector<2x32xf32>
    %cst_56 = arith.constant 1.000000e+00 : f32
    %105 = vector.broadcast %cst_56 : f32 to vector<2x32xf32>
    %106 = arith.addf %105, %104 : vector<2x32xf32>
    %107 = arith.divf %105, %106 : vector<2x32xf32>
    %c3_57 = arith.constant 3 : index
    %c0_58 = arith.constant 0 : index
    %c0_59 = arith.constant 0 : index
    %108 = vector.load %arg1[%c3_57, %c0_58, %c0_59] : memref<8x2x32xf32, #tpu.memory_space<vmem>>, vector<1x2x32xf32>
    %109 = vector.shape_cast %108 : vector<1x2x32xf32> to vector<2x32xf32>
    %110 = arith.addf %109, %98 : vector<2x32xf32>
    %111 = arith.negf %110 : vector<2x32xf32>
    %112 = math.exp %111 : vector<2x32xf32>
    %cst_60 = arith.constant 1.000000e+00 : f32
    %113 = vector.broadcast %cst_60 : f32 to vector<2x32xf32>
    %114 = arith.addf %113, %112 : vector<2x32xf32>
    %115 = arith.divf %113, %114 : vector<2x32xf32>
    %c3_61 = arith.constant 3 : index
    %c0_62 = arith.constant 0 : index
    %c0_63 = arith.constant 0 : index
    %116 = vector.load %arg2[%c3_61, %c0_62, %c0_63] : memref<8x2x32xf32, #tpu.memory_space<vmem>>, vector<1x2x32xf32>
    %117 = vector.shape_cast %116 : vector<1x2x32xf32> to vector<2x32xf32>
    %118 = arith.addf %99, %5 : vector<2x32xf32>
    %119 = arith.mulf %107, %118 : vector<2x32xf32>
    %120 = arith.addf %117, %119 : vector<2x32xf32>
    %121 = math.tanh %120 : vector<2x32xf32>
    %cst_64 = arith.constant 1.000000e+00 : f32
    %122 = vector.broadcast %cst_64 : f32 to vector<2x32xf32>
    %123 = arith.subf %122, %115 : vector<2x32xf32>
    %124 = arith.mulf %123, %121 : vector<2x32xf32>
    %125 = arith.mulf %115, %96 : vector<2x32xf32>
    %126 = arith.addf %124, %125 : vector<2x32xf32>
    %cst_65 = arith.constant dense<0.000000e+00> : vector<2x32xf32>
    %127 = tpu.matmul %126, %0, %cst_65 {dimension_numbers = #tpu.dot_dimension_numbers<[1], [0], [0], [1], [0, 0, 1, 1], [], []>} : vector<2x32xf32>, vector<32x32xf32>, vector<2x32xf32> -> vector<2x32xf32>
    %cst_66 = arith.constant dense<0.000000e+00> : vector<2x32xf32>
    %128 = tpu.matmul %126, %1, %cst_66 {dimension_numbers = #tpu.dot_dimension_numbers<[1], [0], [0], [1], [0, 0, 1, 1], [], []>} : vector<2x32xf32>, vector<32x32xf32>, vector<2x32xf32> -> vector<2x32xf32>
    %cst_67 = arith.constant dense<0.000000e+00> : vector<2x32xf32>
    %129 = tpu.matmul %126, %2, %cst_67 {dimension_numbers = #tpu.dot_dimension_numbers<[1], [0], [0], [1], [0, 0, 1, 1], [], []>} : vector<2x32xf32>, vector<32x32xf32>, vector<2x32xf32> -> vector<2x32xf32>
    %c4 = arith.constant 4 : index
    %c0_68 = arith.constant 0 : index
    %c0_69 = arith.constant 0 : index
    %130 = vector.load %arg0[%c4, %c0_68, %c0_69] : memref<8x2x32xf32, #tpu.memory_space<vmem>>, vector<1x2x32xf32>
    %131 = vector.shape_cast %130 : vector<1x2x32xf32> to vector<2x32xf32>
    %132 = arith.addf %131, %127 : vector<2x32xf32>
    %133 = arith.negf %132 : vector<2x32xf32>
    %134 = math.exp %133 : vector<2x32xf32>
    %cst_70 = arith.constant 1.000000e+00 : f32
    %135 = vector.broadcast %cst_70 : f32 to vector<2x32xf32>
    %136 = arith.addf %135, %134 : vector<2x32xf32>
    %137 = arith.divf %135, %136 : vector<2x32xf32>
    %c4_71 = arith.constant 4 : index
    %c0_72 = arith.constant 0 : index
    %c0_73 = arith.constant 0 : index
    %138 = vector.load %arg1[%c4_71, %c0_72, %c0_73] : memref<8x2x32xf32, #tpu.memory_space<vmem>>, vector<1x2x32xf32>
    %139 = vector.shape_cast %138 : vector<1x2x32xf32> to vector<2x32xf32>
    %140 = arith.addf %139, %128 : vector<2x32xf32>
    %141 = arith.negf %140 : vector<2x32xf32>
    %142 = math.exp %141 : vector<2x32xf32>
    %cst_74 = arith.constant 1.000000e+00 : f32
    %143 = vector.broadcast %cst_74 : f32 to vector<2x32xf32>
    %144 = arith.addf %143, %142 : vector<2x32xf32>
    %145 = arith.divf %143, %144 : vector<2x32xf32>
    %c4_75 = arith.constant 4 : index
    %c0_76 = arith.constant 0 : index
    %c0_77 = arith.constant 0 : index
    %146 = vector.load %arg2[%c4_75, %c0_76, %c0_77] : memref<8x2x32xf32, #tpu.memory_space<vmem>>, vector<1x2x32xf32>
    %147 = vector.shape_cast %146 : vector<1x2x32xf32> to vector<2x32xf32>
    %148 = arith.addf %129, %5 : vector<2x32xf32>
    %149 = arith.mulf %137, %148 : vector<2x32xf32>
    %150 = arith.addf %147, %149 : vector<2x32xf32>
    %151 = math.tanh %150 : vector<2x32xf32>
    %cst_78 = arith.constant 1.000000e+00 : f32
    %152 = vector.broadcast %cst_78 : f32 to vector<2x32xf32>
    %153 = arith.subf %152, %145 : vector<2x32xf32>
    %154 = arith.mulf %153, %151 : vector<2x32xf32>
    %155 = arith.mulf %145, %126 : vector<2x32xf32>
    %156 = arith.addf %154, %155 : vector<2x32xf32>
    %cst_79 = arith.constant dense<0.000000e+00> : vector<2x32xf32>
    %157 = tpu.matmul %156, %0, %cst_79 {dimension_numbers = #tpu.dot_dimension_numbers<[1], [0], [0], [1], [0, 0, 1, 1], [], []>} : vector<2x32xf32>, vector<32x32xf32>, vector<2x32xf32> -> vector<2x32xf32>
    %cst_80 = arith.constant dense<0.000000e+00> : vector<2x32xf32>
    %158 = tpu.matmul %156, %1, %cst_80 {dimension_numbers = #tpu.dot_dimension_numbers<[1], [0], [0], [1], [0, 0, 1, 1], [], []>} : vector<2x32xf32>, vector<32x32xf32>, vector<2x32xf32> -> vector<2x32xf32>
    %cst_81 = arith.constant dense<0.000000e+00> : vector<2x32xf32>
    %159 = tpu.matmul %156, %2, %cst_81 {dimension_numbers = #tpu.dot_dimension_numbers<[1], [0], [0], [1], [0, 0, 1, 1], [], []>} : vector<2x32xf32>, vector<32x32xf32>, vector<2x32xf32> -> vector<2x32xf32>
    %c5 = arith.constant 5 : index
    %c0_82 = arith.constant 0 : index
    %c0_83 = arith.constant 0 : index
    %160 = vector.load %arg0[%c5, %c0_82, %c0_83] : memref<8x2x32xf32, #tpu.memory_space<vmem>>, vector<1x2x32xf32>
    %161 = vector.shape_cast %160 : vector<1x2x32xf32> to vector<2x32xf32>
    %162 = arith.addf %161, %157 : vector<2x32xf32>
    %163 = arith.negf %162 : vector<2x32xf32>
    %164 = math.exp %163 : vector<2x32xf32>
    %cst_84 = arith.constant 1.000000e+00 : f32
    %165 = vector.broadcast %cst_84 : f32 to vector<2x32xf32>
    %166 = arith.addf %165, %164 : vector<2x32xf32>
    %167 = arith.divf %165, %166 : vector<2x32xf32>
    %c5_85 = arith.constant 5 : index
    %c0_86 = arith.constant 0 : index
    %c0_87 = arith.constant 0 : index
    %168 = vector.load %arg1[%c5_85, %c0_86, %c0_87] : memref<8x2x32xf32, #tpu.memory_space<vmem>>, vector<1x2x32xf32>
    %169 = vector.shape_cast %168 : vector<1x2x32xf32> to vector<2x32xf32>
    %170 = arith.addf %169, %158 : vector<2x32xf32>
    %171 = arith.negf %170 : vector<2x32xf32>
    %172 = math.exp %171 : vector<2x32xf32>
    %cst_88 = arith.constant 1.000000e+00 : f32
    %173 = vector.broadcast %cst_88 : f32 to vector<2x32xf32>
    %174 = arith.addf %173, %172 : vector<2x32xf32>
    %175 = arith.divf %173, %174 : vector<2x32xf32>
    %c5_89 = arith.constant 5 : index
    %c0_90 = arith.constant 0 : index
    %c0_91 = arith.constant 0 : index
    %176 = vector.load %arg2[%c5_89, %c0_90, %c0_91] : memref<8x2x32xf32, #tpu.memory_space<vmem>>, vector<1x2x32xf32>
    %177 = vector.shape_cast %176 : vector<1x2x32xf32> to vector<2x32xf32>
    %178 = arith.addf %159, %5 : vector<2x32xf32>
    %179 = arith.mulf %167, %178 : vector<2x32xf32>
    %180 = arith.addf %177, %179 : vector<2x32xf32>
    %181 = math.tanh %180 : vector<2x32xf32>
    %cst_92 = arith.constant 1.000000e+00 : f32
    %182 = vector.broadcast %cst_92 : f32 to vector<2x32xf32>
    %183 = arith.subf %182, %175 : vector<2x32xf32>
    %184 = arith.mulf %183, %181 : vector<2x32xf32>
    %185 = arith.mulf %175, %156 : vector<2x32xf32>
    %186 = arith.addf %184, %185 : vector<2x32xf32>
    %cst_93 = arith.constant dense<0.000000e+00> : vector<2x32xf32>
    %187 = tpu.matmul %186, %0, %cst_93 {dimension_numbers = #tpu.dot_dimension_numbers<[1], [0], [0], [1], [0, 0, 1, 1], [], []>} : vector<2x32xf32>, vector<32x32xf32>, vector<2x32xf32> -> vector<2x32xf32>
    %cst_94 = arith.constant dense<0.000000e+00> : vector<2x32xf32>
    %188 = tpu.matmul %186, %1, %cst_94 {dimension_numbers = #tpu.dot_dimension_numbers<[1], [0], [0], [1], [0, 0, 1, 1], [], []>} : vector<2x32xf32>, vector<32x32xf32>, vector<2x32xf32> -> vector<2x32xf32>
    %cst_95 = arith.constant dense<0.000000e+00> : vector<2x32xf32>
    %189 = tpu.matmul %186, %2, %cst_95 {dimension_numbers = #tpu.dot_dimension_numbers<[1], [0], [0], [1], [0, 0, 1, 1], [], []>} : vector<2x32xf32>, vector<32x32xf32>, vector<2x32xf32> -> vector<2x32xf32>
    %c6 = arith.constant 6 : index
    %c0_96 = arith.constant 0 : index
    %c0_97 = arith.constant 0 : index
    %190 = vector.load %arg0[%c6, %c0_96, %c0_97] : memref<8x2x32xf32, #tpu.memory_space<vmem>>, vector<1x2x32xf32>
    %191 = vector.shape_cast %190 : vector<1x2x32xf32> to vector<2x32xf32>
    %192 = arith.addf %191, %187 : vector<2x32xf32>
    %193 = arith.negf %192 : vector<2x32xf32>
    %194 = math.exp %193 : vector<2x32xf32>
    %cst_98 = arith.constant 1.000000e+00 : f32
    %195 = vector.broadcast %cst_98 : f32 to vector<2x32xf32>
    %196 = arith.addf %195, %194 : vector<2x32xf32>
    %197 = arith.divf %195, %196 : vector<2x32xf32>
    %c6_99 = arith.constant 6 : index
    %c0_100 = arith.constant 0 : index
    %c0_101 = arith.constant 0 : index
    %198 = vector.load %arg1[%c6_99, %c0_100, %c0_101] : memref<8x2x32xf32, #tpu.memory_space<vmem>>, vector<1x2x32xf32>
    %199 = vector.shape_cast %198 : vector<1x2x32xf32> to vector<2x32xf32>
    %200 = arith.addf %199, %188 : vector<2x32xf32>
    %201 = arith.negf %200 : vector<2x32xf32>
    %202 = math.exp %201 : vector<2x32xf32>
    %cst_102 = arith.constant 1.000000e+00 : f32
    %203 = vector.broadcast %cst_102 : f32 to vector<2x32xf32>
    %204 = arith.addf %203, %202 : vector<2x32xf32>
    %205 = arith.divf %203, %204 : vector<2x32xf32>
    %c6_103 = arith.constant 6 : index
    %c0_104 = arith.constant 0 : index
    %c0_105 = arith.constant 0 : index
    %206 = vector.load %arg2[%c6_103, %c0_104, %c0_105] : memref<8x2x32xf32, #tpu.memory_space<vmem>>, vector<1x2x32xf32>
    %207 = vector.shape_cast %206 : vector<1x2x32xf32> to vector<2x32xf32>
    %208 = arith.addf %189, %5 : vector<2x32xf32>
    %209 = arith.mulf %197, %208 : vector<2x32xf32>
    %210 = arith.addf %207, %209 : vector<2x32xf32>
    %211 = math.tanh %210 : vector<2x32xf32>
    %cst_106 = arith.constant 1.000000e+00 : f32
    %212 = vector.broadcast %cst_106 : f32 to vector<2x32xf32>
    %213 = arith.subf %212, %205 : vector<2x32xf32>
    %214 = arith.mulf %213, %211 : vector<2x32xf32>
    %215 = arith.mulf %205, %186 : vector<2x32xf32>
    %216 = arith.addf %214, %215 : vector<2x32xf32>
    %cst_107 = arith.constant dense<0.000000e+00> : vector<2x32xf32>
    %217 = tpu.matmul %216, %0, %cst_107 {dimension_numbers = #tpu.dot_dimension_numbers<[1], [0], [0], [1], [0, 0, 1, 1], [], []>} : vector<2x32xf32>, vector<32x32xf32>, vector<2x32xf32> -> vector<2x32xf32>
    %cst_108 = arith.constant dense<0.000000e+00> : vector<2x32xf32>
    %218 = tpu.matmul %216, %1, %cst_108 {dimension_numbers = #tpu.dot_dimension_numbers<[1], [0], [0], [1], [0, 0, 1, 1], [], []>} : vector<2x32xf32>, vector<32x32xf32>, vector<2x32xf32> -> vector<2x32xf32>
    %cst_109 = arith.constant dense<0.000000e+00> : vector<2x32xf32>
    %219 = tpu.matmul %216, %2, %cst_109 {dimension_numbers = #tpu.dot_dimension_numbers<[1], [0], [0], [1], [0, 0, 1, 1], [], []>} : vector<2x32xf32>, vector<32x32xf32>, vector<2x32xf32> -> vector<2x32xf32>
    %c7 = arith.constant 7 : index
    %c0_110 = arith.constant 0 : index
    %c0_111 = arith.constant 0 : index
    %220 = vector.load %arg0[%c7, %c0_110, %c0_111] : memref<8x2x32xf32, #tpu.memory_space<vmem>>, vector<1x2x32xf32>
    %221 = vector.shape_cast %220 : vector<1x2x32xf32> to vector<2x32xf32>
    %222 = arith.addf %221, %217 : vector<2x32xf32>
    %223 = arith.negf %222 : vector<2x32xf32>
    %224 = math.exp %223 : vector<2x32xf32>
    %cst_112 = arith.constant 1.000000e+00 : f32
    %225 = vector.broadcast %cst_112 : f32 to vector<2x32xf32>
    %226 = arith.addf %225, %224 : vector<2x32xf32>
    %227 = arith.divf %225, %226 : vector<2x32xf32>
    %c7_113 = arith.constant 7 : index
    %c0_114 = arith.constant 0 : index
    %c0_115 = arith.constant 0 : index
    %228 = vector.load %arg1[%c7_113, %c0_114, %c0_115] : memref<8x2x32xf32, #tpu.memory_space<vmem>>, vector<1x2x32xf32>
    %229 = vector.shape_cast %228 : vector<1x2x32xf32> to vector<2x32xf32>
    %230 = arith.addf %229, %218 : vector<2x32xf32>
    %231 = arith.negf %230 : vector<2x32xf32>
    %232 = math.exp %231 : vector<2x32xf32>
    %cst_116 = arith.constant 1.000000e+00 : f32
    %233 = vector.broadcast %cst_116 : f32 to vector<2x32xf32>
    %234 = arith.addf %233, %232 : vector<2x32xf32>
    %235 = arith.divf %233, %234 : vector<2x32xf32>
    %c7_117 = arith.constant 7 : index
    %c0_118 = arith.constant 0 : index
    %c0_119 = arith.constant 0 : index
    %236 = vector.load %arg2[%c7_117, %c0_118, %c0_119] : memref<8x2x32xf32, #tpu.memory_space<vmem>>, vector<1x2x32xf32>
    %237 = vector.shape_cast %236 : vector<1x2x32xf32> to vector<2x32xf32>
    %238 = arith.addf %219, %5 : vector<2x32xf32>
    %239 = arith.mulf %227, %238 : vector<2x32xf32>
    %240 = arith.addf %237, %239 : vector<2x32xf32>
    %241 = math.tanh %240 : vector<2x32xf32>
    %cst_120 = arith.constant 1.000000e+00 : f32
    %242 = vector.broadcast %cst_120 : f32 to vector<2x32xf32>
    %243 = arith.subf %242, %235 : vector<2x32xf32>
    %244 = arith.mulf %243, %241 : vector<2x32xf32>
    %245 = arith.mulf %235, %216 : vector<2x32xf32>
    %246 = arith.addf %244, %245 : vector<2x32xf32>
    %c0_121 = arith.constant 0 : index
    %c0_122 = arith.constant 0 : index
    %247 = vector.load %arg11[%c0_121, %c0_122] : memref<2x32xf32, #tpu.memory_space<vmem>>, vector<2x32xf32>
    tpu.vector_store %arg11[%c0_121, %c0_122], %246 {strides = array<i32>} : memref<2x32xf32, #tpu.memory_space<vmem>>, vector<2x32xf32>,
    %c0_123 = arith.constant 0 : index
    %c0_124 = arith.constant 0 : index
    %248 = vector.load %arg8[%c0_123, %c0_124] : memref<32x10xf32, #tpu.memory_space<vmem>>, vector<32x10xf32>
    %cst_125 = arith.constant dense<0.000000e+00> : vector<2x10xf32>
    %249 = tpu.matmul %246, %248, %cst_125 {dimension_numbers = #tpu.dot_dimension_numbers<[1], [0], [0], [1], [0, 0, 1, 1], [], []>} : vector<2x32xf32>, vector<32x10xf32>, vector<2x10xf32> -> vector<2x10xf32>
    %c0_126 = arith.constant 0 : index
    %c0_127 = arith.constant 0 : index
    %250 = vector.load %arg9[%c0_126, %c0_127] : memref<1x10xf32, #tpu.memory_space<vmem>>, vector<1x10xf32>
    %251 = vector.broadcast %250 : vector<1x10xf32> to vector<2x10xf32>
    %252 = arith.addf %249, %251 : vector<2x10xf32>
    %c0_128 = arith.constant 0 : index
    %c0_129 = arith.constant 0 : index
    %253 = vector.load %arg10[%c0_128, %c0_129] : memref<2x10xf32, #tpu.memory_space<vmem>>, vector<2x10xf32>
    tpu.vector_store %arg10[%c0_128, %c0_129], %252 {strides = array<i32>} : memref<2x10xf32, #tpu.memory_space<vmem>>, vector<2x10xf32>,
    return
  }
}

</mosaic_0001>

<llo_original>
// kernel: gru_rnn_forward.1
$region0: #{gru_rnn_forward.1}
  #allocation0 [shape = 'u32[]', space=smem, size = 0x4, offset = 0x4, fixed_abs, tag = 'smem constant byte address 0x4 - core index']
  #allocation1 [shape = 'u32[144,128]{1,0:T(1,128)}', space=vmem, size = 0x12000, scoped, tag = 'internal scratch']
  %s0 = inlined_call_operand.vmem [shape: f32[8,2,32], index: 0, kind: input, shape index: {}]
  %s1 = inlined_call_operand.vmem [shape: f32[8,2,32], index: 1, kind: input, shape index: {}]
  %s2 = inlined_call_operand.vmem [shape: f32[8,2,32], index: 2, kind: input, shape index: {}]
  %s3 = inlined_call_operand.vmem [shape: f32[2,32], index: 3, kind: input, shape index: {}]
  %s4 = inlined_call_operand.vmem [shape: f32[32,32], index: 4, kind: input, shape index: {}]
  %s5 = inlined_call_operand.vmem [shape: f32[32,32], index: 5, kind: input, shape index: {}]
  %s6 = inlined_call_operand.vmem [shape: f32[32,32], index: 6, kind: input, shape index: {}]
  %s7 = inlined_call_operand.vmem [shape: f32[1,32], index: 7, kind: input, shape index: {}]
  %s8 = inlined_call_operand.vmem [shape: f32[32,10], index: 8, kind: input, shape index: {}]
  %s9 = inlined_call_operand.vmem [shape: f32[1,10], index: 9, kind: input, shape index: {}]
  %s10 = inlined_call_operand.hbm [shape: f32[2,10], index: 10, kind: output, shape index: {0}]
  %s11 = inlined_call_operand.hbm [shape: f32[2,32], index: 11, kind: output, shape index: {1}]
  %12 = xla_tuple %s10, %s11
  %s13 = sld [smem:[#allocation0]]
  $region58: #{gru_rnn_forward.1} parent=0
    _
  %s15 = ssub.s32 1, %s13
  %s16 = scalar_select 0, %s15, %s13
  $region1: #{gru_rnn_forward.1} parent=0
    #allocation2 [shape = 'u8[1024]{0}', space=vmem, size = 0x400, scoped, tag = 'output window, operand 0, single buffered']
    #allocation3 [shape = 's32[1]{0}', space=sflag, size = 0x4, scoped, tag = 'scoped memory for gru_rnn_forward.1']
    #allocation4 [shape = 'u8[1024]{0}', space=vmem, size = 0x400, scoped, tag = 'output window, operand 1, single buffered']
    #allocation5 [shape = 's32[1]{0}', space=sflag, size = 0x4, scoped, tag = 'scoped memory for gru_rnn_forward.1']
    %17 = vsyncpa [#allocation3], 0
    %18 = vsyncpa [#allocation5], 0
    // Predicated region
    $region2: #{gru_rnn_forward.1} parent=1 // pred_check
      _
    $region3: #{gru_rnn_forward.1} parent=1 // pred_check_branch
      %20 = sbr.rel (0) target = $region5
    $region4: #{gru_rnn_forward.1} parent=1 // pred_region
      _
    $region5: #{gru_rnn_forward.1} parent=1 // pred_fallthru
      _
    // Predicated region
    $region6: #{gru_rnn_forward.1} parent=1 // pred_check
      _
    $region7: #{gru_rnn_forward.1} parent=1 // pred_check_branch
      %22 = sbr.rel (0) target = $region9
    $region8: #{gru_rnn_forward.1} parent=1 // pred_region
      _
    $region9: #{gru_rnn_forward.1} parent=1 // pred_fallthru
      _
    // Predicated region
    $region10: #{gru_rnn_forward.1} parent=1 // pred_check
      _
    $region11: #{gru_rnn_forward.1} parent=1 // pred_check_branch
      %24 = sbr.rel (0) target = $region13
    $region12: #{gru_rnn_forward.1} parent=1 // pred_region
      _
    $region13: #{gru_rnn_forward.1} parent=1 // pred_fallthru
      _
    // Predicated region
    $region14: #{gru_rnn_forward.1} parent=1 // pred_check
      _
    $region15: #{gru_rnn_forward.1} parent=1 // pred_check_branch
      %26 = sbr.rel (0) target = $region17
    $region16: #{gru_rnn_forward.1} parent=1 // pred_region
      _
    $region17: #{gru_rnn_forward.1} parent=1 // pred_fallthru
      _
    // Predicated region
    $region18: #{gru_rnn_forward.1} parent=1 // pred_check
      _
    $region19: #{gru_rnn_forward.1} parent=1 // pred_check_branch
      %28 = sbr.rel (0) target = $region21
    $region20: #{gru_rnn_forward.1} parent=1 // pred_region
      _
    $region21: #{gru_rnn_forward.1} parent=1 // pred_fallthru
      _
    // Predicated region
    $region22: #{gru_rnn_forward.1} parent=1 // pred_check
      _
    $region23: #{gru_rnn_forward.1} parent=1 // pred_check_branch
      %30 = sbr.rel (0) target = $region25
    $region24: #{gru_rnn_forward.1} parent=1 // pred_region
      _
    $region25: #{gru_rnn_forward.1} parent=1 // pred_fallthru
      _
    // Predicated region
    $region26: #{gru_rnn_forward.1} parent=1 // pred_check
      _
    $region27: #{gru_rnn_forward.1} parent=1 // pred_check_branch
      %32 = sbr.rel (0) target = $region29
    $region28: #{gru_rnn_forward.1} parent=1 // pred_region
      _
    $region29: #{gru_rnn_forward.1} parent=1 // pred_fallthru
      _
    // Predicated region
    $region30: #{gru_rnn_forward.1} parent=1 // pred_check
      _
    $region31: #{gru_rnn_forward.1} parent=1 // pred_check_branch
      %34 = sbr.rel (0) target = $region33
    $region32: #{gru_rnn_forward.1} parent=1 // pred_region
      _
    $region33: #{gru_rnn_forward.1} parent=1 // pred_fallthru
      _
    // Predicated region
    $region34: #{gru_rnn_forward.1} parent=1 // pred_check
      _
    $region35: #{gru_rnn_forward.1} parent=1 // pred_check_branch
      %36 = sbr.rel (0) target = $region37
    $region36: #{gru_rnn_forward.1} parent=1 // pred_region
      _
    $region37: #{gru_rnn_forward.1} parent=1 // pred_fallthru
      _
    // Predicated region
    $region38: #{gru_rnn_forward.1} parent=1 // pred_check
      _
    $region39: #{gru_rnn_forward.1} parent=1 // pred_check_branch
      %38 = sbr.rel (0) target = $region41
    $region40: #{gru_rnn_forward.1} parent=1 // pred_region
      _
    $region41: #{gru_rnn_forward.1} parent=1 // pred_fallthru
      _
    %v39 = vld [vmem:[%s4] sm:$0xff]
    %v40 = vld [vmem:[%s4 + $0x8] sm:$0xff]
    %v41 = vld [vmem:[%s4 + $0x10] sm:$0xff]
    %v42 = vld [vmem:[%s4 + $0x18] sm:$0xff]
    %v43 = vld [vmem:[%s5] sm:$0xff]
    %v44 = vld [vmem:[%s5 + $0x8] sm:$0xff]
    %v45 = vld [vmem:[%s5 + $0x10] sm:$0xff]
    %v46 = vld [vmem:[%s5 + $0x18] sm:$0xff]
    %v47 = vld [vmem:[%s6] sm:$0xff]
    %v48 = vld [vmem:[%s6 + $0x8] sm:$0xff]
    %v49 = vld [vmem:[%s6 + $0x10] sm:$0xff]
    %v50 = vld [vmem:[%s6 + $0x18] sm:$0xff]
    %v51 = vld [vmem:[%s7] sm:$0x1]
    %v53 = vlaneseq
    %v54 = vshrl.u32 %v53, 7
    %v55 = vsub.s32 0, %v54
    %v56 = vrot.slane %v51, %v55
    %v58 = vld [vmem:[%s3] sm:$0x3]
    %vm59 = vcmask 261120
    %v61 = vsel %vm59, %v58, 0
    %63 = vmatprep.subr.mxu0 0.0
    %64 = vmatpush1.msra.mxu0 %v39
    %65 = vmatprep.subr.mxu0 0.0
    %66 = vmatpush1.msra.mxu0 %v40
    %67 = vmatprep.subr.mxu0 0.0
    %68 = vmatpush1.msra.mxu0 %v41
    %69 = vmatprep.subr.mxu0 0.0
    %70 = vmatpush1.msra.mxu0 %v42
    %71 = vmatprep.subr.mxu0 0.0
    %72 = vmatpush1.msra.mxu0 0.0
    %73 = vmatprep.subr.mxu0 0.0
    %74 = vmatpush1.msra.mxu0 0.0
    %75 = vmatprep.subr.mxu0 0.0
    %76 = vmatpush1.msra.mxu0 0.0
    %77 = vmatprep.subr.mxu0 0.0
    %78 = vmatpush1.msra.mxu0 0.0
    %79 = vmatprep.subr.mxu0 0.0
    %80 = vmatpush1.msra.mxu0 0.0
    %81 = vmatprep.subr.mxu0 0.0
    %82 = vmatpush1.msra.mxu0 0.0
    %83 = vmatprep.subr.mxu0 0.0
    %84 = vmatpush1.msra.mxu0 0.0
    %85 = vmatprep.subr.mxu0 0.0
    %86 = vmatpush1.msra.mxu0 0.0
    %87 = vmatprep.subr.mxu0 0.0
    %88 = vmatpush1.msra.mxu0 0.0
    %89 = vmatprep.subr.mxu0 0.0
    %90 = vmatpush1.msra.mxu0 0.0
    %91 = vmatprep.subr.mxu0 0.0
    %92 = vmatpush1.msra.mxu0 0.0
    %93 = vmatprep.subr.mxu0 0.0
    %94 = vmatpush1.msra.mxu0 0.0
    %95 = vmatprep.subr.mxu0 0.0
    %96 = vmatpush1.msra.mxu0 0.0
    %97 = vmatprep.subr.mxu0 0.0
    %98 = vmatpush1.msra.mxu0 0.0
    %99 = vmatprep.subr.mxu0 0.0
    %100 = vmatpush1.msra.mxu0 0.0
    %101 = vmatprep.subr.mxu0 0.0
    %102 = vmatpush1.msra.mxu0 0.0
    %103 = vmatprep.subr.mxu0 0.0
    %104 = vmatpush1.msra.mxu0 0.0
    %105 = vmatprep.subr.mxu0 0.0
    %106 = vmatpush1.msra.mxu0 0.0
    %107 = vmatprep.subr.mxu0 0.0
    %108 = vmatpush1.msra.mxu0 0.0
    %109 = vmatprep.subr.mxu0 0.0
    %110 = vmatpush1.msra.mxu0 0.0
    %111 = vmatprep.subr.mxu0 0.0
    %112 = vmatpush1.msra.mxu0 0.0
    %113 = vmatprep.subr.mxu0 0.0
    %114 = vmatpush1.msra.mxu0 0.0
    %115 = vmatprep.subr.mxu0 0.0
    %116 = vmatpush1.msra.mxu0 0.0
    %117 = vmatprep.subr.mxu0 0.0
    %118 = vmatpush1.msra.mxu0 0.0
    %119 = vmatprep.subr.mxu0 0.0
    %120 = vmatpush1.msra.mxu0 0.0
    %121 = vmatprep.subr.mxu0 0.0
    %122 = vmatpush1.msra.mxu0 0.0
    %123 = vmatprep.subr.mxu0 0.0
    %124 = vmatpush1.msra.mxu0 0.0
    %125 = vmatprep.subr.mxu0 0.0
    %126 = vmatpush1.msra.mxu0 0.0
    %127 = vmatprep.mubr.f32.mxu0 0.0
    %128 = vmatmul.mubr.f32.gmra.mrb[0].mxu0 %v61
    %v129 = vpop.f32.mrb[0].mxu0
    %v130 = vadd.f32 0.0, %v129
    %v131 = vpop.f32.mrb[0].mxu0
    %132 = vdwg.mxu0
    %133 = vmatprep.subr.mxu0 0.0
    %134 = vmatpush1.msra.mxu0 %v43
    %135 = vmatprep.subr.mxu0 0.0
    %136 = vmatpush1.msra.mxu0 %v44
    %137 = vmatprep.subr.mxu0 0.0
    %138 = vmatpush1.msra.mxu0 %v45
    %139 = vmatprep.subr.mxu0 0.0
    %140 = vmatpush1.msra.mxu0 %v46
    %141 = vmatprep.subr.mxu0 0.0
    %142 = vmatpush1.msra.mxu0 0.0
    %143 = vmatprep.subr.mxu0 0.0
    %144 = vmatpush1.msra.mxu0 0.0
    %145 = vmatprep.subr.mxu0 0.0
    %146 = vmatpush1.msra.mxu0 0.0
    %147 = vmatprep.subr.mxu0 0.0
    %148 = vmatpush1.msra.mxu0 0.0
    %149 = vmatprep.subr.mxu0 0.0
    %150 = vmatpush1.msra.mxu0 0.0
    %151 = vmatprep.subr.mxu0 0.0
    %152 = vmatpush1.msra.mxu0 0.0
    %153 = vmatprep.subr.mxu0 0.0
    %154 = vmatpush1.msra.mxu0 0.0
    %155 = vmatprep.subr.mxu0 0.0
    %156 = vmatpush1.msra.mxu0 0.0
    %157 = vmatprep.subr.mxu0 0.0
    %158 = vmatpush1.msra.mxu0 0.0
    %159 = vmatprep.subr.mxu0 0.0
    %160 = vmatpush1.msra.mxu0 0.0
    %161 = vmatprep.subr.mxu0 0.0
    %162 = vmatpush1.msra.mxu0 0.0
    %163 = vmatprep.subr.mxu0 0.0
    %164 = vmatpush1.msra.mxu0 0.0
    %165 = vmatprep.subr.mxu0 0.0
    %166 = vmatpush1.msra.mxu0 0.0
    %167 = vmatprep.subr.mxu0 0.0
    %168 = vmatpush1.msra.mxu0 0.0
    %169 = vmatprep.subr.mxu0 0.0
    %170 = vmatpush1.msra.mxu0 0.0
    %171 = vmatprep.subr.mxu0 0.0
    %172 = vmatpush1.msra.mxu0 0.0
    %173 = vmatprep.subr.mxu0 0.0
    %174 = vmatpush1.msra.mxu0 0.0
    %175 = vmatprep.subr.mxu0 0.0
    %176 = vmatpush1.msra.mxu0 0.0
    %177 = vmatprep.subr.mxu0 0.0
    %178 = vmatpush1.msra.mxu0 0.0
    %179 = vmatprep.subr.mxu0 0.0
    %180 = vmatpush1.msra.mxu0 0.0
    %181 = vmatprep.subr.mxu0 0.0
    %182 = vmatpush1.msra.mxu0 0.0
    %183 = vmatprep.subr.mxu0 0.0
    %184 = vmatpush1.msra.mxu0 0.0
    %185 = vmatprep.subr.mxu0 0.0
    %186 = vmatpush1.msra.mxu0 0.0
    %187 = vmatprep.subr.mxu0 0.0
    %188 = vmatpush1.msra.mxu0 0.0
    %189 = vmatprep.subr.mxu0 0.0
    %190 = vmatpush1.msra.mxu0 0.0
    %191 = vmatprep.subr.mxu0 0.0
    %192 = vmatpush1.msra.mxu0 0.0
    %193 = vmatprep.subr.mxu0 0.0
    %194 = vmatpush1.msra.mxu0 0.0
    %195 = vmatprep.subr.mxu0 0.0
    %196 = vmatpush1.msra.mxu0 0.0
    %197 = vmatprep.mubr.f32.mxu0 0.0
    %198 = vmatmul.mubr.f32.gmra.mrb[0].mxu0 %v61
    %v199 = vpop.f32.mrb[0].mxu0
    %v200 = vadd.f32 0.0, %v199
    %v201 = vpop.f32.mrb[0].mxu0
    %202 = vdwg.mxu0
    %v203 = vld [vmem:[%s0] sm:$0x3]
    %v204 = vadd.f32 %v203, %v130
    %v205 = vxor.u32 %v204, 2147483648
    %v206 = vmul.f32 %v205, 1.442695
    %v207 = vpow.pop %v206
    %v208 = vadd.f32 %v207, 1.0
    %v209 = vrcp.pop %v208
    %v210 = vmul.f32 1.0, %v209
    %v211 = vld [vmem:[%s1] sm:$0x3]
    %v212 = vadd.f32 %v211, %v200
    %v213 = vxor.u32 %v212, 2147483648
    %v214 = vmul.f32 %v213, 1.442695
    %v215 = vpow.pop %v214
    %v216 = vadd.f32 %v215, 1.0
    %v217 = vrcp.pop %v216
    %v218 = vmul.f32 1.0, %v217
    %v219 = vld [vmem:[%s2] sm:$0x3]
    %220 = vmatprep.subr.mxu0 0.0
    %221 = vmatpush1.msra.mxu0 %v47
    %222 = vmatprep.subr.mxu0 0.0
    %223 = vmatpush1.msra.mxu0 %v48
    %224 = vmatprep.subr.mxu0 0.0
    %225 = vmatpush1.msra.mxu0 %v49
    %226 = vmatprep.subr.mxu0 0.0
    %227 = vmatpush1.msra.mxu0 %v50
    %228 = vmatprep.subr.mxu0 0.0
    %229 = vmatpush1.msra.mxu0 0.0
    %230 = vmatprep.subr.mxu0 0.0
    %231 = vmatpush1.msra.mxu0 0.0
    %232 = vmatprep.subr.mxu0 0.0
    %233 = vmatpush1.msra.mxu0 0.0
    %234 = vmatprep.subr.mxu0 0.0
    %235 = vmatpush1.msra.mxu0 0.0
    %236 = vmatprep.subr.mxu0 0.0
    %237 = vmatpush1.msra.mxu0 0.0
    %238 = vmatprep.subr.mxu0 0.0
    %239 = vmatpush1.msra.mxu0 0.0
    %240 = vmatprep.subr.mxu0 0.0
    %241 = vmatpush1.msra.mxu0 0.0
    %242 = vmatprep.subr.mxu0 0.0
    %243 = vmatpush1.msra.mxu0 0.0
    %244 = vmatprep.subr.mxu0 0.0
    %245 = vmatpush1.msra.mxu0 0.0
    %246 = vmatprep.subr.mxu0 0.0
    %247 = vmatpush1.msra.mxu0 0.0
    %248 = vmatprep.subr.mxu0 0.0
    %249 = vmatpush1.msra.mxu0 0.0
    %250 = vmatprep.subr.mxu0 0.0
    %251 = vmatpush1.msra.mxu0 0.0
    %252 = vmatprep.subr.mxu0 0.0
    %253 = vmatpush1.msra.mxu0 0.0
    %254 = vmatprep.subr.mxu0 0.0
    %255 = vmatpush1.msra.mxu0 0.0
    %256 = vmatprep.subr.mxu0 0.0
    %257 = vmatpush1.msra.mxu0 0.0
    %258 = vmatprep.subr.mxu0 0.0
    %259 = vmatpush1.msra.mxu0 0.0
    %260 = vmatprep.subr.mxu0 0.0
    %261 = vmatpush1.msra.mxu0 0.0
    %262 = vmatprep.subr.mxu0 0.0
    %263 = vmatpush1.msra.mxu0 0.0
    %264 = vmatprep.subr.mxu0 0.0
    %265 = vmatpush1.msra.mxu0 0.0
    %266 = vmatprep.subr.mxu0 0.0
    %267 = vmatpush1.msra.mxu0 0.0
    %268 = vmatprep.subr.mxu0 0.0
    %269 = vmatpush1.msra.mxu0 0.0
    %270 = vmatprep.subr.mxu0 0.0
    %271 = vmatpush1.msra.mxu0 0.0
    %272 = vmatprep.subr.mxu0 0.0
    %273 = vmatpush1.msra.mxu0 0.0
    %274 = vmatprep.subr.mxu0 0.0
    %275 = vmatpush1.msra.mxu0 0.0
    %276 = vmatprep.subr.mxu0 0.0
    %277 = vmatpush1.msra.mxu0 0.0
    %278 = vmatprep.subr.mxu0 0.0
    %279 = vmatpush1.msra.mxu0 0.0
    %280 = vmatprep.subr.mxu0 0.0
    %281 = vmatpush1.msra.mxu0 0.0
    %282 = vmatprep.subr.mxu0 0.0
    %283 = vmatpush1.msra.mxu0 0.0
    %284 = vmatprep.mubr.f32.mxu0 0.0
    %285 = vmatmul.mubr.f32.gmra.mrb[0].mxu0 %v61
    %v286 = vpop.f32.mrb[0].mxu0
    %v287 = vadd.f32 %v56, %v286
    %v288 = vpop.f32.mrb[0].mxu0
    %289 = vdwg.mxu0
    %v290 = vmul.f32 %v210, %v287
    %v291 = vadd.f32 %v219, %v290
    %v292 = vtanh.pop %v291
    %v293 = vsub.f32 1.0, %v218
    %v294 = vmul.f32 %v293, %v292
    %v295 = vmul.f32 %v218, %v58
    %v296 = vadd.f32 %v294, %v295
    %v298 = vsel %vm59, %v296, 0
    %300 = vmatprep.subr.mxu0 0.0
    %301 = vmatpush1.msra.mxu0 %v39
    %302 = vmatprep.subr.mxu0 0.0
    %303 = vmatpush1.msra.mxu0 %v40
    %304 = vmatprep.subr.mxu0 0.0
    %305 = vmatpush1.msra.mxu0 %v41
    %306 = vmatprep.subr.mxu0 0.0
    %307 = vmatpush1.msra.mxu0 %v42
    %308 = vmatprep.subr.mxu0 0.0
    %309 = vmatpush1.msra.mxu0 0.0
    %310 = vmatprep.subr.mxu0 0.0
    %311 = vmatpush1.msra.mxu0 0.0
    %312 = vmatprep.subr.mxu0 0.0
    %313 = vmatpush1.msra.mxu0 0.0
    %314 = vmatprep.subr.mxu0 0.0
    %315 = vmatpush1.msra.mxu0 0.0
    %316 = vmatprep.subr.mxu0 0.0
    %317 = vmatpush1.msra.mxu0 0.0
    %318 = vmatprep.subr.mxu0 0.0
    %319 = vmatpush1.msra.mxu0 0.0
    %320 = vmatprep.subr.mxu0 0.0
    %321 = vmatpush1.msra.mxu0 0.0
    %322 = vmatprep.subr.mxu0 0.0
    %323 = vmatpush1.msra.mxu0 0.0
    %324 = vmatprep.subr.mxu0 0.0
    %325 = vmatpush1.msra.mxu0 0.0
    %326 = vmatprep.subr.mxu0 0.0
    %327 = vmatpush1.msra.mxu0 0.0
    %328 = vmatprep.subr.mxu0 0.0
    %329 = vmatpush1.msra.mxu0 0.0
    %330 = vmatprep.subr.mxu0 0.0
    %331 = vmatpush1.msra.mxu0 0.0
    %332 = vmatprep.subr.mxu0 0.0
    %333 = vmatpush1.msra.mxu0 0.0
    %334 = vmatprep.subr.mxu0 0.0
    %335 = vmatpush1.msra.mxu0 0.0
    %336 = vmatprep.subr.mxu0 0.0
    %337 = vmatpush1.msra.mxu0 0.0
    %338 = vmatprep.subr.mxu0 0.0
    %339 = vmatpush1.msra.mxu0 0.0
    %340 = vmatprep.subr.mxu0 0.0
    %341 = vmatpush1.msra.mxu0 0.0
    %342 = vmatprep.subr.mxu0 0.0
    %343 = vmatpush1.msra.mxu0 0.0
    %344 = vmatprep.subr.mxu0 0.0
    %345 = vmatpush1.msra.mxu0 0.0
    %346 = vmatprep.subr.mxu0 0.0
    %347 = vmatpush1.msra.mxu0 0.0
    %348 = vmatprep.subr.mxu0 0.0
    %349 = vmatpush1.msra.mxu0 0.0
    %350 = vmatprep.subr.mxu0 0.0
    %351 = vmatpush1.msra.mxu0 0.0
    %352 = vmatprep.subr.mxu0 0.0
    %353 = vmatpush1.msra.mxu0 0.0
    %354 = vmatprep.subr.mxu0 0.0
    %355 = vmatpush1.msra.mxu0 0.0
    %356 = vmatprep.subr.mxu0 0.0
    %357 = vmatpush1.msra.mxu0 0.0
    %358 = vmatprep.subr.mxu0 0.0
    %359 = vmatpush1.msra.mxu0 0.0
    %360 = vmatprep.subr.mxu0 0.0
    %361 = vmatpush1.msra.mxu0 0.0
    %362 = vmatprep.subr.mxu0 0.0
    %363 = vmatpush1.msra.mxu0 0.0
    %364 = vmatprep.mubr.f32.mxu0 0.0
    %365 = vmatmul.mubr.f32.gmra.mrb[0].mxu0 %v298
    %v366 = vpop.f32.mrb[0].mxu0
    %v367 = vadd.f32 0.0, %v366
    %v368 = vpop.f32.mrb[0].mxu0
    %369 = vdwg.mxu0
    %370 = vmatprep.subr.mxu0 0.0
    %371 = vmatpush1.msra.mxu0 %v43
    %372 = vmatprep.subr.mxu0 0.0
    %373 = vmatpush1.msra.mxu0 %v44
    %374 = vmatprep.subr.mxu0 0.0
    %375 = vmatpush1.msra.mxu0 %v45
    %376 = vmatprep.subr.mxu0 0.0
    %377 = vmatpush1.msra.mxu0 %v46
    %378 = vmatprep.subr.mxu0 0.0
    %379 = vmatpush1.msra.mxu0 0.0
    %380 = vmatprep.subr.mxu0 0.0
    %381 = vmatpush1.msra.mxu0 0.0
    %382 = vmatprep.subr.mxu0 0.0
    %383 = vmatpush1.msra.mxu0 0.0
    %384 = vmatprep.subr.mxu0 0.0
    %385 = vmatpush1.msra.mxu0 0.0
    %386 = vmatprep.subr.mxu0 0.0
    %387 = vmatpush1.msra.mxu0 0.0
    %388 = vmatprep.subr.mxu0 0.0
    %389 = vmatpush1.msra.mxu0 0.0
    %390 = vmatprep.subr.mxu0 0.0
    %391 = vmatpush1.msra.mxu0 0.0
    %392 = vmatprep.subr.mxu0 0.0
    %393 = vmatpush1.msra.mxu0 0.0
    %394 = vmatprep.subr.mxu0 0.0
    %395 = vmatpush1.msra.mxu0 0.0
    %396 = vmatprep.subr.mxu0 0.0
    %397 = vmatpush1.msra.mxu0 0.0
    %398 = vmatprep.subr.mxu0 0.0
    %399 = vmatpush1.msra.mxu0 0.0
    %400 = vmatprep.subr.mxu0 0.0
    %401 = vmatpush1.msra.mxu0 0.0
    %402 = vmatprep.subr.mxu0 0.0
    %403 = vmatpush1.msra.mxu0 0.0
    %404 = vmatprep.subr.mxu0 0.0
    %405 = vmatpush1.msra.mxu0 0.0
    %406 = vmatprep.subr.mxu0 0.0
    %407 = vmatpush1.msra.mxu0 0.0
    %408 = vmatprep.subr.mxu0 0.0
    %409 = vmatpush1.msra.mxu0 0.0
    %410 = vmatprep.subr.mxu0 0.0
    %411 = vmatpush1.msra.mxu0 0.0
    %412 = vmatprep.subr.mxu0 0.0
    %413 = vmatpush1.msra.mxu0 0.0
    %414 = vmatprep.subr.mxu0 0.0
    %415 = vmatpush1.msra.mxu0 0.0
    %416 = vmatprep.subr.mxu0 0.0
    %417 = vmatpush1.msra.mxu0 0.0
    %418 = vmatprep.subr.mxu0 0.0
    %419 = vmatpush1.msra.mxu0 0.0
    %420 = vmatprep.subr.mxu0 0.0
    %421 = vmatpush1.msra.mxu0 0.0
    %422 = vmatprep.subr.mxu0 0.0
    %423 = vmatpush1.msra.mxu0 0.0
    %424 = vmatprep.subr.mxu0 0.0
    %425 = vmatpush1.msra.mxu0 0.0
    %426 = vmatprep.subr.mxu0 0.0
    %427 = vmatpush1.msra.mxu0 0.0
    %428 = vmatprep.subr.mxu0 0.0
    %429 = vmatpush1.msra.mxu0 0.0
    %430 = vmatprep.subr.mxu0 0.0
    %431 = vmatpush1.msra.mxu0 0.0
    %432 = vmatprep.subr.mxu0 0.0
    %433 = vmatpush1.msra.mxu0 0.0
    %434 = vmatprep.mubr.f32.mxu0 0.0
    %435 = vmatmul.mubr.f32.gmra.mrb[0].mxu0 %v298
    %v436 = vpop.f32.mrb[0].mxu0
    %v437 = vadd.f32 0.0, %v436
    %v438 = vpop.f32.mrb[0].mxu0
    %439 = vdwg.mxu0
    %s440 = scalar_lea.vmem %s0, 2
    %v441 = vld [vmem:[%s440] sm:$0x3]
    %v442 = vadd.f32 %v441, %v367
    %v443 = vxor.u32 %v442, 2147483648
    %v444 = vmul.f32 %v443, 1.442695
    %v445 = vpow.pop %v444
    %v446 = vadd.f32 %v445, 1.0
    %v447 = vrcp.pop %v446
    %v448 = vmul.f32 1.0, %v447
    %s449 = scalar_lea.vmem %s1, 2
    %v450 = vld [vmem:[%s449] sm:$0x3]
    %v451 = vadd.f32 %v450, %v437
    %v452 = vxor.u32 %v451, 2147483648
    %v453 = vmul.f32 %v452, 1.442695
    %v454 = vpow.pop %v453
    %v455 = vadd.f32 %v454, 1.0
    %v456 = vrcp.pop %v455
    %v457 = vmul.f32 1.0, %v456
    %s458 = scalar_lea.vmem %s2, 2
    %v459 = vld [vmem:[%s458] sm:$0x3]
    %460 = vmatprep.subr.mxu0 0.0
    %461 = vmatpush1.msra.mxu0 %v47
    %462 = vmatprep.subr.mxu0 0.0
    %463 = vmatpush1.msra.mxu0 %v48
    %464 = vmatprep.subr.mxu0 0.0
    %465 = vmatpush1.msra.mxu0 %v49
    %466 = vmatprep.subr.mxu0 0.0
    %467 = vmatpush1.msra.mxu0 %v50
    %468 = vmatprep.subr.mxu0 0.0
    %469 = vmatpush1.msra.mxu0 0.0
    %470 = vmatprep.subr.mxu0 0.0
    %471 = vmatpush1.msra.mxu0 0.0
    %472 = vmatprep.subr.mxu0 0.0
    %473 = vmatpush1.msra.mxu0 0.0
    %474 = vmatprep.subr.mxu0 0.0
    %475 = vmatpush1.msra.mxu0 0.0
    %476 = vmatprep.subr.mxu0 0.0
    %477 = vmatpush1.msra.mxu0 0.0
    %478 = vmatprep.subr.mxu0 0.0
    %479 = vmatpush1.msra.mxu0 0.0
    %480 = vmatprep.subr.mxu0 0.0
    %481 = vmatpush1.msra.mxu0 0.0
    %482 = vmatprep.subr.mxu0 0.0
    %483 = vmatpush1.msra.mxu0 0.0
    %484 = vmatprep.subr.mxu0 0.0
    %485 = vmatpush1.msra.mxu0 0.0
    %486 = vmatprep.subr.mxu0 0.0
    %487 = vmatpush1.msra.mxu0 0.0
    %488 = vmatprep.subr.mxu0 0.0
    %489 = vmatpush1.msra.mxu0 0.0
    %490 = vmatprep.subr.mxu0 0.0
    %491 = vmatpush1.msra.mxu0 0.0
    %492 = vmatprep.subr.mxu0 0.0
    %493 = vmatpush1.msra.mxu0 0.0
    %494 = vmatprep.subr.mxu0 0.0
    %495 = vmatpush1.msra.mxu0 0.0
    %496 = vmatprep.subr.mxu0 0.0
    %497 = vmatpush1.msra.mxu0 0.0
    %498 = vmatprep.subr.mxu0 0.0
    %499 = vmatpush1.msra.mxu0 0.0
    %500 = vmatprep.subr.mxu0 0.0
    %501 = vmatpush1.msra.mxu0 0.0
    %502 = vmatprep.subr.mxu0 0.0
    %503 = vmatpush1.msra.mxu0 0.0
    %504 = vmatprep.subr.mxu0 0.0
    %505 = vmatpush1.msra.mxu0 0.0
    %506 = vmatprep.subr.mxu0 0.0
    %507 = vmatpush1.msra.mxu0 0.0
    %508 = vmatprep.subr.mxu0 0.0
    %509 = vmatpush1.msra.mxu0 0.0
    %510 = vmatprep.subr.mxu0 0.0
    %511 = vmatpush1.msra.mxu0 0.0
    %512 = vmatprep.subr.mxu0 0.0
    %513 = vmatpush1.msra.mxu0 0.0
    %514 = vmatprep.subr.mxu0 0.0
    %515 = vmatpush1.msra.mxu0 0.0
    %516 = vmatprep.subr.mxu0 0.0
    %517 = vmatpush1.msra.mxu0 0.0
    %518 = vmatprep.subr.mxu0 0.0
    %519 = vmatpush1.msra.mxu0 0.0
    %520 = vmatprep.subr.mxu0 0.0
    %521 = vmatpush1.msra.mxu0 0.0
    %522 = vmatprep.subr.mxu0 0.0
    %523 = vmatpush1.msra.mxu0 0.0
    %524 = vmatprep.mubr.f32.mxu0 0.0
    %525 = vmatmul.mubr.f32.gmra.mrb[0].mxu0 %v298
    %v526 = vpop.f32.mrb[0].mxu0
    %v527 = vadd.f32 %v56, %v526
    %v528 = vpop.f32.mrb[0].mxu0
    %529 = vdwg.mxu0
    %v530 = vmul.f32 %v448, %v527
    %v531 = vadd.f32 %v459, %v530
    %v532 = vtanh.pop %v531
    %v533 = vsub.f32 1.0, %v457
    %v534 = vmul.f32 %v533, %v532
    %v535 = vmul.f32 %v457, %v296
    %v536 = vadd.f32 %v534, %v535
    %v538 = vsel %vm59, %v536, 0
    %540 = vmatprep.subr.mxu0 0.0
    %541 = vmatpush1.msra.mxu0 %v39
    %542 = vmatprep.subr.mxu0 0.0
    %543 = vmatpush1.msra.mxu0 %v40
    %544 = vmatprep.subr.mxu0 0.0
    %545 = vmatpush1.msra.mxu0 %v41
    %546 = vmatprep.subr.mxu0 0.0
    %547 = vmatpush1.msra.mxu0 %v42
    %548 = vmatprep.subr.mxu0 0.0
    %549 = vmatpush1.msra.mxu0 0.0
    %550 = vmatprep.subr.mxu0 0.0
    %551 = vmatpush1.msra.mxu0 0.0
    %552 = vmatprep.subr.mxu0 0.0
    %553 = vmatpush1.msra.mxu0 0.0
    %554 = vmatprep.subr.mxu0 0.0
    %555 = vmatpush1.msra.mxu0 0.0
    %556 = vmatprep.subr.mxu0 0.0
    %557 = vmatpush1.msra.mxu0 0.0
    %558 = vmatprep.subr.mxu0 0.0
    %559 = vmatpush1.msra.mxu0 0.0
    %560 = vmatprep.subr.mxu0 0.0
    %561 = vmatpush1.msra.mxu0 0.0
    %562 = vmatprep.subr.mxu0 0.0
    %563 = vmatpush1.msra.mxu0 0.0
    %564 = vmatprep.subr.mxu0 0.0
    %565 = vmatpush1.msra.mxu0 0.0
    %566 = vmatprep.subr.mxu0 0.0
    %567 = vmatpush1.msra.mxu0 0.0
    %568 = vmatprep.subr.mxu0 0.0
    %569 = vmatpush1.msra.mxu0 0.0
    %570 = vmatprep.subr.mxu0 0.0
    %571 = vmatpush1.msra.mxu0 0.0
    %572 = vmatprep.subr.mxu0 0.0
    %573 = vmatpush1.msra.mxu0 0.0
    %574 = vmatprep.subr.mxu0 0.0
    %575 = vmatpush1.msra.mxu0 0.0
    %576 = vmatprep.subr.mxu0 0.0
    %577 = vmatpush1.msra.mxu0 0.0
    %578 = vmatprep.subr.mxu0 0.0
    %579 = vmatpush1.msra.mxu0 0.0
    %580 = vmatprep.subr.mxu0 0.0
    %581 = vmatpush1.msra.mxu0 0.0
    %582 = vmatprep.subr.mxu0 0.0
    %583 = vmatpush1.msra.mxu0 0.0
    %584 = vmatprep.subr.mxu0 0.0
    %585 = vmatpush1.msra.mxu0 0.0
    %586 = vmatprep.subr.mxu0 0.0
    %587 = vmatpush1.msra.mxu0 0.0
    %588 = vmatprep.subr.mxu0 0.0
    %589 = vmatpush1.msra.mxu0 0.0
    %590 = vmatprep.subr.mxu0 0.0
    %591 = vmatpush1.msra.mxu0 0.0
    %592 = vmatprep.subr.mxu0 0.0
    %593 = vmatpush1.msra.mxu0 0.0
    %594 = vmatprep.subr.mxu0 0.0
    %595 = vmatpush1.msra.mxu0 0.0
    %596 = vmatprep.subr.mxu0 0.0
    %597 = vmatpush1.msra.mxu0 0.0
    %598 = vmatprep.subr.mxu0 0.0
    %599 = vmatpush1.msra.mxu0 0.0
    %600 = vmatprep.subr.mxu0 0.0
    %601 = vmatpush1.msra.mxu0 0.0
    %602 = vmatprep.subr.mxu0 0.0
    %603 = vmatpush1.msra.mxu0 0.0
    %604 = vmatprep.mubr.f32.mxu0 0.0
    %605 = vmatmul.mubr.f32.gmra.mrb[0].mxu0 %v538
    %v606 = vpop.f32.mrb[0].mxu0
    %v607 = vadd.f32 0.0, %v606
    %v608 = vpop.f32.mrb[0].mxu0
    %609 = vdwg.mxu0
    %610 = vmatprep.subr.mxu0 0.0
    %611 = vmatpush1.msra.mxu0 %v43
    %612 = vmatprep.subr.mxu0 0.0
    %613 = vmatpush1.msra.mxu0 %v44
    %614 = vmatprep.subr.mxu0 0.0
    %615 = vmatpush1.msra.mxu0 %v45
    %616 = vmatprep.subr.mxu0 0.0
    %617 = vmatpush1.msra.mxu0 %v46
    %618 = vmatprep.subr.mxu0 0.0
    %619 = vmatpush1.msra.mxu0 0.0
    %620 = vmatprep.subr.mxu0 0.0
    %621 = vmatpush1.msra.mxu0 0.0
    %622 = vmatprep.subr.mxu0 0.0
    %623 = vmatpush1.msra.mxu0 0.0
    %624 = vmatprep.subr.mxu0 0.0
    %625 = vmatpush1.msra.mxu0 0.0
    %626 = vmatprep.subr.mxu0 0.0
    %627 = vmatpush1.msra.mxu0 0.0
    %628 = vmatprep.subr.mxu0 0.0
    %629 = vmatpush1.msra.mxu0 0.0
    %630 = vmatprep.subr.mxu0 0.0
    %631 = vmatpush1.msra.mxu0 0.0
    %632 = vmatprep.subr.mxu0 0.0
    %633 = vmatpush1.msra.mxu0 0.0
    %634 = vmatprep.subr.mxu0 0.0
    %635 = vmatpush1.msra.mxu0 0.0
    %636 = vmatprep.subr.mxu0 0.0
    %637 = vmatpush1.msra.mxu0 0.0
    %638 = vmatprep.subr.mxu0 0.0
    %639 = vmatpush1.msra.mxu0 0.0
    %640 = vmatprep.subr.mxu0 0.0
    %641 = vmatpush1.msra.mxu0 0.0
    %642 = vmatprep.subr.mxu0 0.0
    %643 = vmatpush1.msra.mxu0 0.0
    %644 = vmatprep.subr.mxu0 0.0
    %645 = vmatpush1.msra.mxu0 0.0
    %646 = vmatprep.subr.mxu0 0.0
    %647 = vmatpush1.msra.mxu0 0.0
    %648 = vmatprep.subr.mxu0 0.0
    %649 = vmatpush1.msra.mxu0 0.0
    %650 = vmatprep.subr.mxu0 0.0
    %651 = vmatpush1.msra.mxu0 0.0
    %652 = vmatprep.subr.mxu0 0.0
    %653 = vmatpush1.msra.mxu0 0.0
    %654 = vmatprep.subr.mxu0 0.0
    %655 = vmatpush1.msra.mxu0 0.0
    %656 = vmatprep.subr.mxu0 0.0
    %657 = vmatpush1.msra.mxu0 0.0
    %658 = vmatprep.subr.mxu0 0.0
    %659 = vmatpush1.msra.mxu0 0.0
    %660 = vmatprep.subr.mxu0 0.0
    %661 = vmatpush1.msra.mxu0 0.0
    %662 = vmatprep.subr.mxu0 0.0
    %663 = vmatpush1.msra.mxu0 0.0
    %664 = vmatprep.subr.mxu0 0.0
    %665 = vmatpush1.msra.mxu0 0.0
    %666 = vmatprep.subr.mxu0 0.0
    %667 = vmatpush1.msra.mxu0 0.0
    %668 = vmatprep.subr.mxu0 0.0
    %669 = vmatpush1.msra.mxu0 0.0
    %670 = vmatprep.subr.mxu0 0.0
    %671 = vmatpush1.msra.mxu0 0.0
    %672 = vmatprep.subr.mxu0 0.0
    %673 = vmatpush1.msra.mxu0 0.0
    %674 = vmatprep.mubr.f32.mxu0 0.0
    %675 = vmatmul.mubr.f32.gmra.mrb[0].mxu0 %v538
    %v676 = vpop.f32.mrb[0].mxu0
    %v677 = vadd.f32 0.0, %v676
    %v678 = vpop.f32.mrb[0].mxu0
    %679 = vdwg.mxu0
    %s680 = scalar_lea.vmem %s0, 4
    %v681 = vld [vmem:[%s680] sm:$0x3]
    %v682 = vadd.f32 %v681, %v607
    %v683 = vxor.u32 %v682, 2147483648
    %v684 = vmul.f32 %v683, 1.442695
    %v685 = vpow.pop %v684
    %v686 = vadd.f32 %v685, 1.0
    %v687 = vrcp.pop %v686
    %v688 = vmul.f32 1.0, %v687
    %s689 = scalar_lea.vmem %s1, 4
    %v690 = vld [vmem:[%s689] sm:$0x3]
    %v691 = vadd.f32 %v690, %v677
    %v692 = vxor.u32 %v691, 2147483648
    %v693 = vmul.f32 %v692, 1.442695
    %v694 = vpow.pop %v693
    %v695 = vadd.f32 %v694, 1.0
    %v696 = vrcp.pop %v695
    %v697 = vmul.f32 1.0, %v696
    %s698 = scalar_lea.vmem %s2, 4
    %v699 = vld [vmem:[%s698] sm:$0x3]
    %700 = vmatprep.subr.mxu0 0.0
    %701 = vmatpush1.msra.mxu0 %v47
    %702 = vmatprep.subr.mxu0 0.0
    %703 = vmatpush1.msra.mxu0 %v48
    %704 = vmatprep.subr.mxu0 0.0
    %705 = vmatpush1.msra.mxu0 %v49
    %706 = vmatprep.subr.mxu0 0.0
    %707 = vmatpush1.msra.mxu0 %v50
    %708 = vmatprep.subr.mxu0 0.0
    %709 = vmatpush1.msra.mxu0 0.0
    %710 = vmatprep.subr.mxu0 0.0
    %711 = vmatpush1.msra.mxu0 0.0
    %712 = vmatprep.subr.mxu0 0.0
    %713 = vmatpush1.msra.mxu0 0.0
    %714 = vmatprep.subr.mxu0 0.0
    %715 = vmatpush1.msra.mxu0 0.0
    %716 = vmatprep.subr.mxu0 0.0
    %717 = vmatpush1.msra.mxu0 0.0
    %718 = vmatprep.subr.mxu0 0.0
    %719 = vmatpush1.msra.mxu0 0.0
    %720 = vmatprep.subr.mxu0 0.0
    %721 = vmatpush1.msra.mxu0 0.0
    %722 = vmatprep.subr.mxu0 0.0
    %723 = vmatpush1.msra.mxu0 0.0
    %724 = vmatprep.subr.mxu0 0.0
    %725 = vmatpush1.msra.mxu0 0.0
    %726 = vmatprep.subr.mxu0 0.0
    %727 = vmatpush1.msra.mxu0 0.0
    %728 = vmatprep.subr.mxu0 0.0
    %729 = vmatpush1.msra.mxu0 0.0
    %730 = vmatprep.subr.mxu0 0.0
    %731 = vmatpush1.msra.mxu0 0.0
    %732 = vmatprep.subr.mxu0 0.0
    %733 = vmatpush1.msra.mxu0 0.0
    %734 = vmatprep.subr.mxu0 0.0
    %735 = vmatpush1.msra.mxu0 0.0
    %736 = vmatprep.subr.mxu0 0.0
    %737 = vmatpush1.msra.mxu0 0.0
    %738 = vmatprep.subr.mxu0 0.0
    %739 = vmatpush1.msra.mxu0 0.0
    %740 = vmatprep.subr.mxu0 0.0
    %741 = vmatpush1.msra.mxu0 0.0
    %742 = vmatprep.subr.mxu0 0.0
    %743 = vmatpush1.msra.mxu0 0.0
    %744 = vmatprep.subr.mxu0 0.0
    %745 = vmatpush1.msra.mxu0 0.0
    %746 = vmatprep.subr.mxu0 0.0
    %747 = vmatpush1.msra.mxu0 0.0
    %748 = vmatprep.subr.mxu0 0.0
    %749 = vmatpush1.msra.mxu0 0.0
    %750 = vmatprep.subr.mxu0 0.0
    %751 = vmatpush1.msra.mxu0 0.0
    %752 = vmatprep.subr.mxu0 0.0
    %753 = vmatpush1.msra.mxu0 0.0
    %754 = vmatprep.subr.mxu0 0.0
    %755 = vmatpush1.msra.mxu0 0.0
    %756 = vmatprep.subr.mxu0 0.0
    %757 = vmatpush1.msra.mxu0 0.0
    %758 = vmatprep.subr.mxu0 0.0
    %759 = vmatpush1.msra.mxu0 0.0
    %760 = vmatprep.subr.mxu0 0.0
    %761 = vmatpush1.msra.mxu0 0.0
    %762 = vmatprep.subr.mxu0 0.0
    %763 = vmatpush1.msra.mxu0 0.0
    %764 = vmatprep.mubr.f32.mxu0 0.0
    %765 = vmatmul.mubr.f32.gmra.mrb[0].mxu0 %v538
    %v766 = vpop.f32.mrb[0].mxu0
    %v767 = vadd.f32 %v56, %v766
    %v768 = vpop.f32.mrb[0].mxu0
    %769 = vdwg.mxu0
    %v770 = vmul.f32 %v688, %v767
    %v771 = vadd.f32 %v699, %v770
    %v772 = vtanh.pop %v771
    %v773 = vsub.f32 1.0, %v697
    %v774 = vmul.f32 %v773, %v772
    %v775 = vmul.f32 %v697, %v536
    %v776 = vadd.f32 %v774, %v775
    %v778 = vsel %vm59, %v776, 0
    %780 = vmatprep.subr.mxu0 0.0
    %781 = vmatpush1.msra.mxu0 %v39
    %782 = vmatprep.subr.mxu0 0.0
    %783 = vmatpush1.msra.mxu0 %v40
    %784 = vmatprep.subr.mxu0 0.0
    %785 = vmatpush1.msra.mxu0 %v41
    %786 = vmatprep.subr.mxu0 0.0
    %787 = vmatpush1.msra.mxu0 %v42
    %788 = vmatprep.subr.mxu0 0.0
    %789 = vmatpush1.msra.mxu0 0.0
    %790 = vmatprep.subr.mxu0 0.0
    %791 = vmatpush1.msra.mxu0 0.0
    %792 = vmatprep.subr.mxu0 0.0
    %793 = vmatpush1.msra.mxu0 0.0
    %794 = vmatprep.subr.mxu0 0.0
    %795 = vmatpush1.msra.mxu0 0.0
    %796 = vmatprep.subr.mxu0 0.0
    %797 = vmatpush1.msra.mxu0 0.0
    %798 = vmatprep.subr.mxu0 0.0
    %799 = vmatpush1.msra.mxu0 0.0
    %800 = vmatprep.subr.mxu0 0.0
    %801 = vmatpush1.msra.mxu0 0.0
    %802 = vmatprep.subr.mxu0 0.0
    %803 = vmatpush1.msra.mxu0 0.0
    %804 = vmatprep.subr.mxu0 0.0
    %805 = vmatpush1.msra.mxu0 0.0
    %806 = vmatprep.subr.mxu0 0.0
    %807 = vmatpush1.msra.mxu0 0.0
    %808 = vmatprep.subr.mxu0 0.0
    %809 = vmatpush1.msra.mxu0 0.0
    %810 = vmatprep.subr.mxu0 0.0
    %811 = vmatpush1.msra.mxu0 0.0
    %812 = vmatprep.subr.mxu0 0.0
    %813 = vmatpush1.msra.mxu0 0.0
    %814 = vmatprep.subr.mxu0 0.0
    %815 = vmatpush1.msra.mxu0 0.0
    %816 = vmatprep.subr.mxu0 0.0
    %817 = vmatpush1.msra.mxu0 0.0
    %818 = vmatprep.subr.mxu0 0.0
    %819 = vmatpush1.msra.mxu0 0.0
    %820 = vmatprep.subr.mxu0 0.0
    %821 = vmatpush1.msra.mxu0 0.0
    %822 = vmatprep.subr.mxu0 0.0
    %823 = vmatpush1.msra.mxu0 0.0
    %824 = vmatprep.subr.mxu0 0.0
    %825 = vmatpush1.msra.mxu0 0.0
    %826 = vmatprep.subr.mxu0 0.0
    %827 = vmatpush1.msra.mxu0 0.0
    %828 = vmatprep.subr.mxu0 0.0
    %829 = vmatpush1.msra.mxu0 0.0
    %830 = vmatprep.subr.mxu0 0.0
    %831 = vmatpush1.msra.mxu0 0.0
    %832 = vmatprep.subr.mxu0 0.0
    %833 = vmatpush1.msra.mxu0 0.0
    %834 = vmatprep.subr.mxu0 0.0
    %835 = vmatpush1.msra.mxu0 0.0
    %836 = vmatprep.subr.mxu0 0.0
    %837 = vmatpush1.msra.mxu0 0.0
    %838 = vmatprep.subr.mxu0 0.0
    %839 = vmatpush1.msra.mxu0 0.0
    %840 = vmatprep.subr.mxu0 0.0
    %841 = vmatpush1.msra.mxu0 0.0
    %842 = vmatprep.subr.mxu0 0.0
    %843 = vmatpush1.msra.mxu0 0.0
    %844 = vmatprep.mubr.f32.mxu0 0.0
    %845 = vmatmul.mubr.f32.gmra.mrb[0].mxu0 %v778
    %v846 = vpop.f32.mrb[0].mxu0
    %v847 = vadd.f32 0.0, %v846
    %v848 = vpop.f32.mrb[0].mxu0
    %849 = vdwg.mxu0
    %850 = vmatprep.subr.mxu0 0.0
    %851 = vmatpush1.msra.mxu0 %v43
    %852 = vmatprep.subr.mxu0 0.0
    %853 = vmatpush1.msra.mxu0 %v44
    %854 = vmatprep.subr.mxu0 0.0
    %855 = vmatpush1.msra.mxu0 %v45
    %856 = vmatprep.subr.mxu0 0.0
    %857 = vmatpush1.msra.mxu0 %v46
    %858 = vmatprep.subr.mxu0 0.0
    %859 = vmatpush1.msra.mxu0 0.0
    %860 = vmatprep.subr.mxu0 0.0
    %861 = vmatpush1.msra.mxu0 0.0
    %862 = vmatprep.subr.mxu0 0.0
    %863 = vmatpush1.msra.mxu0 0.0
    %864 = vmatprep.subr.mxu0 0.0
    %865 = vmatpush1.msra.mxu0 0.0
    %866 = vmatprep.subr.mxu0 0.0
    %867 = vmatpush1.msra.mxu0 0.0
    %868 = vmatprep.subr.mxu0 0.0
    %869 = vmatpush1.msra.mxu0 0.0
    %870 = vmatprep.subr.mxu0 0.0
    %871 = vmatpush1.msra.mxu0 0.0
    %872 = vmatprep.subr.mxu0 0.0
    %873 = vmatpush1.msra.mxu0 0.0
    %874 = vmatprep.subr.mxu0 0.0
    %875 = vmatpush1.msra.mxu0 0.0
    %876 = vmatprep.subr.mxu0 0.0
    %877 = vmatpush1.msra.mxu0 0.0
    %878 = vmatprep.subr.mxu0 0.0
    %879 = vmatpush1.msra.mxu0 0.0
    %880 = vmatprep.subr.mxu0 0.0
    %881 = vmatpush1.msra.mxu0 0.0
    %882 = vmatprep.subr.mxu0 0.0
    %883 = vmatpush1.msra.mxu0 0.0
    %884 = vmatprep.subr.mxu0 0.0
    %885 = vmatpush1.msra.mxu0 0.0
    %886 = vmatprep.subr.mxu0 0.0
    %887 = vmatpush1.msra.mxu0 0.0
    %888 = vmatprep.subr.mxu0 0.0
    %889 = vmatpush1.msra.mxu0 0.0
    %890 = vmatprep.subr.mxu0 0.0
    %891 = vmatpush1.msra.mxu0 0.0
    %892 = vmatprep.subr.mxu0 0.0
    %893 = vmatpush1.msra.mxu0 0.0
    %894 = vmatprep.subr.mxu0 0.0
    %895 = vmatpush1.msra.mxu0 0.0
    %896 = vmatprep.subr.mxu0 0.0
    %897 = vmatpush1.msra.mxu0 0.0
    %898 = vmatprep.subr.mxu0 0.0
    %899 = vmatpush1.msra.mxu0 0.0
    %900 = vmatprep.subr.mxu0 0.0
    %901 = vmatpush1.msra.mxu0 0.0
    %902 = vmatprep.subr.mxu0 0.0
    %903 = vmatpush1.msra.mxu0 0.0
    %904 = vmatprep.subr.mxu0 0.0
    %905 = vmatpush1.msra.mxu0 0.0
    %906 = vmatprep.subr.mxu0 0.0
    %907 = vmatpush1.msra.mxu0 0.0
    %908 = vmatprep.subr.mxu0 0.0
    %909 = vmatpush1.msra.mxu0 0.0
    %910 = vmatprep.subr.mxu0 0.0
    %911 = vmatpush1.msra.mxu0 0.0
    %912 = vmatprep.subr.mxu0 0.0
    %913 = vmatpush1.msra.mxu0 0.0
    %914 = vmatprep.mubr.f32.mxu0 0.0
    %915 = vmatmul.mubr.f32.gmra.mrb[0].mxu0 %v778
    %v916 = vpop.f32.mrb[0].mxu0
    %v917 = vadd.f32 0.0, %v916
    %v918 = vpop.f32.mrb[0].mxu0
    %919 = vdwg.mxu0
    %s920 = scalar_lea.vmem %s0, 6
    %v921 = vld [vmem:[%s920] sm:$0x3]
    %v922 = vadd.f32 %v921, %v847
    %v923 = vxor.u32 %v922, 2147483648
    %v924 = vmul.f32 %v923, 1.442695
    %v925 = vpow.pop %v924
    %v926 = vadd.f32 %v925, 1.0
    %v927 = vrcp.pop %v926
    %v928 = vmul.f32 1.0, %v927
    %s929 = scalar_lea.vmem %s1, 6
    %v930 = vld [vmem:[%s929] sm:$0x3]
    %v931 = vadd.f32 %v930, %v917
    %v932 = vxor.u32 %v931, 2147483648
    %v933 = vmul.f32 %v932, 1.442695
    %v934 = vpow.pop %v933
    %v935 = vadd.f32 %v934, 1.0
    %v936 = vrcp.pop %v935
    %v937 = vmul.f32 1.0, %v936
    %s938 = scalar_lea.vmem %s2, 6
    %v939 = vld [vmem:[%s938] sm:$0x3]
    %940 = vmatprep.subr.mxu0 0.0
    %941 = vmatpush1.msra.mxu0 %v47
    %942 = vmatprep.subr.mxu0 0.0
    %943 = vmatpush1.msra.mxu0 %v48
    %944 = vmatprep.subr.mxu0 0.0
    %945 = vmatpush1.msra.mxu0 %v49
    %946 = vmatprep.subr.mxu0 0.0
    %947 = vmatpush1.msra.mxu0 %v50
    %948 = vmatprep.subr.mxu0 0.0
    %949 = vmatpush1.msra.mxu0 0.0
    %950 = vmatprep.subr.mxu0 0.0
    %951 = vmatpush1.msra.mxu0 0.0
    %952 = vmatprep.subr.mxu0 0.0
    %953 = vmatpush1.msra.mxu0 0.0
    %954 = vmatprep.subr.mxu0 0.0
    %955 = vmatpush1.msra.mxu0 0.0
    %956 = vmatprep.subr.mxu0 0.0
    %957 = vmatpush1.msra.mxu0 0.0
    %958 = vmatprep.subr.mxu0 0.0
    %959 = vmatpush1.msra.mxu0 0.0
    %960 = vmatprep.subr.mxu0 0.0
    %961 = vmatpush1.msra.mxu0 0.0
    %962 = vmatprep.subr.mxu0 0.0
    %963 = vmatpush1.msra.mxu0 0.0
    %964 = vmatprep.subr.mxu0 0.0
    %965 = vmatpush1.msra.mxu0 0.0
    %966 = vmatprep.subr.mxu0 0.0
    %967 = vmatpush1.msra.mxu0 0.0
    %968 = vmatprep.subr.mxu0 0.0
    %969 = vmatpush1.msra.mxu0 0.0
    %970 = vmatprep.subr.mxu0 0.0
    %971 = vmatpush1.msra.mxu0 0.0
    %972 = vmatprep.subr.mxu0 0.0
    %973 = vmatpush1.msra.mxu0 0.0
    %974 = vmatprep.subr.mxu0 0.0
    %975 = vmatpush1.msra.mxu0 0.0
    %976 = vmatprep.subr.mxu0 0.0
    %977 = vmatpush1.msra.mxu0 0.0
    %978 = vmatprep.subr.mxu0 0.0
    %979 = vmatpush1.msra.mxu0 0.0
    %980 = vmatprep.subr.mxu0 0.0
    %981 = vmatpush1.msra.mxu0 0.0
    %982 = vmatprep.subr.mxu0 0.0
    %983 = vmatpush1.msra.mxu0 0.0
    %984 = vmatprep.subr.mxu0 0.0
    %985 = vmatpush1.msra.mxu0 0.0
    %986 = vmatprep.subr.mxu0 0.0
    %987 = vmatpush1.msra.mxu0 0.0
    %988 = vmatprep.subr.mxu0 0.0
    %989 = vmatpush1.msra.mxu0 0.0
    %990 = vmatprep.subr.mxu0 0.0
    %991 = vmatpush1.msra.mxu0 0.0
    %992 = vmatprep.subr.mxu0 0.0
    %993 = vmatpush1.msra.mxu0 0.0
    %994 = vmatprep.subr.mxu0 0.0
    %995 = vmatpush1.msra.mxu0 0.0
    %996 = vmatprep.subr.mxu0 0.0
    %997 = vmatpush1.msra.mxu0 0.0
    %998 = vmatprep.subr.mxu0 0.0
    %999 = vmatpush1.msra.mxu0 0.0
    %1000 = vmatprep.subr.mxu0 0.0
    %1001 = vmatpush1.msra.mxu0 0.0
    %1002 = vmatprep.subr.mxu0 0.0
    %1003 = vmatpush1.msra.mxu0 0.0
    %1004 = vmatprep.mubr.f32.mxu0 0.0
    %1005 = vmatmul.mubr.f32.gmra.mrb[0].mxu0 %v778
    %v1006 = vpop.f32.mrb[0].mxu0
    %v1007 = vadd.f32 %v56, %v1006
    %v1008 = vpop.f32.mrb[0].mxu0
    %1009 = vdwg.mxu0
    %v1010 = vmul.f32 %v928, %v1007
    %v1011 = vadd.f32 %v939, %v1010
    %v1012 = vtanh.pop %v1011
    %v1013 = vsub.f32 1.0, %v937
    %v1014 = vmul.f32 %v1013, %v1012
    %v1015 = vmul.f32 %v937, %v776
    %v1016 = vadd.f32 %v1014, %v1015
    %v1018 = vsel %vm59, %v1016, 0
    %1020 = vmatprep.subr.mxu0 0.0
    %1021 = vmatpush1.msra.mxu0 %v39
    %1022 = vmatprep.subr.mxu0 0.0
    %1023 = vmatpush1.msra.mxu0 %v40
    %1024 = vmatprep.subr.mxu0 0.0
    %1025 = vmatpush1.msra.mxu0 %v41
    %1026 = vmatprep.subr.mxu0 0.0
    %1027 = vmatpush1.msra.mxu0 %v42
    %1028 = vmatprep.subr.mxu0 0.0
    %1029 = vmatpush1.msra.mxu0 0.0
    %1030 = vmatprep.subr.mxu0 0.0
    %1031 = vmatpush1.msra.mxu0 0.0
    %1032 = vmatprep.subr.mxu0 0.0
    %1033 = vmatpush1.msra.mxu0 0.0
    %1034 = vmatprep.subr.mxu0 0.0
    %1035 = vmatpush1.msra.mxu0 0.0
    %1036 = vmatprep.subr.mxu0 0.0
    %1037 = vmatpush1.msra.mxu0 0.0
    %1038 = vmatprep.subr.mxu0 0.0
    %1039 = vmatpush1.msra.mxu0 0.0
    %1040 = vmatprep.subr.mxu0 0.0
    %1041 = vmatpush1.msra.mxu0 0.0
    %1042 = vmatprep.subr.mxu0 0.0
    %1043 = vmatpush1.msra.mxu0 0.0
    %1044 = vmatprep.subr.mxu0 0.0
    %1045 = vmatpush1.msra.mxu0 0.0
    %1046 = vmatprep.subr.mxu0 0.0
    %1047 = vmatpush1.msra.mxu0 0.0
    %1048 = vmatprep.subr.mxu0 0.0
    %1049 = vmatpush1.msra.mxu0 0.0
    %1050 = vmatprep.subr.mxu0 0.0
    %1051 = vmatpush1.msra.mxu0 0.0
    %1052 = vmatprep.subr.mxu0 0.0
    %1053 = vmatpush1.msra.mxu0 0.0
    %1054 = vmatprep.subr.mxu0 0.0
    %1055 = vmatpush1.msra.mxu0 0.0
    %1056 = vmatprep.subr.mxu0 0.0
    %1057 = vmatpush1.msra.mxu0 0.0
    %1058 = vmatprep.subr.mxu0 0.0
    %1059 = vmatpush1.msra.mxu0 0.0
    %1060 = vmatprep.subr.mxu0 0.0
    %1061 = vmatpush1.msra.mxu0 0.0
    %1062 = vmatprep.subr.mxu0 0.0
    %1063 = vmatpush1.msra.mxu0 0.0
    %1064 = vmatprep.subr.mxu0 0.0
    %1065 = vmatpush1.msra.mxu0 0.0
    %1066 = vmatprep.subr.mxu0 0.0
    %1067 = vmatpush1.msra.mxu0 0.0
    %1068 = vmatprep.subr.mxu0 0.0
    %1069 = vmatpush1.msra.mxu0 0.0
    %1070 = vmatprep.subr.mxu0 0.0
    %1071 = vmatpush1.msra.mxu0 0.0
    %1072 = vmatprep.subr.mxu0 0.0
    %1073 = vmatpush1.msra.mxu0 0.0
    %1074 = vmatprep.subr.mxu0 0.0
    %1075 = vmatpush1.msra.mxu0 0.0
    %1076 = vmatprep.subr.mxu0 0.0
    %1077 = vmatpush1.msra.mxu0 0.0
    %1078 = vmatprep.subr.mxu0 0.0
    %1079 = vmatpush1.msra.mxu0 0.0
    %1080 = vmatprep.subr.mxu0 0.0
    %1081 = vmatpush1.msra.mxu0 0.0
    %1082 = vmatprep.subr.mxu0 0.0
    %1083 = vmatpush1.msra.mxu0 0.0
    %1084 = vmatprep.mubr.f32.mxu0 0.0
    %1085 = vmatmul.mubr.f32.gmra.mrb[0].mxu0 %v1018
    %v1086 = vpop.f32.mrb[0].mxu0
    %v1087 = vadd.f32 0.0, %v1086
    %v1088 = vpop.f32.mrb[0].mxu0
    %1089 = vdwg.mxu0
    %1090 = vmatprep.subr.mxu0 0.0
    %1091 = vmatpush1.msra.mxu0 %v43
    %1092 = vmatprep.subr.mxu0 0.0
    %1093 = vmatpush1.msra.mxu0 %v44
    %1094 = vmatprep.subr.mxu0 0.0
    %1095 = vmatpush1.msra.mxu0 %v45
    %1096 = vmatprep.subr.mxu0 0.0
    %1097 = vmatpush1.msra.mxu0 %v46
    %1098 = vmatprep.subr.mxu0 0.0
    %1099 = vmatpush1.msra.mxu0 0.0
    %1100 = vmatprep.subr.mxu0 0.0
    %1101 = vmatpush1.msra.mxu0 0.0
    %1102 = vmatprep.subr.mxu0 0.0
    %1103 = vmatpush1.msra.mxu0 0.0
    %1104 = vmatprep.subr.mxu0 0.0
    %1105 = vmatpush1.msra.mxu0 0.0
    %1106 = vmatprep.subr.mxu0 0.0
    %1107 = vmatpush1.msra.mxu0 0.0
    %1108 = vmatprep.subr.mxu0 0.0
    %1109 = vmatpush1.msra.mxu0 0.0
    %1110 = vmatprep.subr.mxu0 0.0
    %1111 = vmatpush1.msra.mxu0 0.0
    %1112 = vmatprep.subr.mxu0 0.0
    %1113 = vmatpush1.msra.mxu0 0.0
    %1114 = vmatprep.subr.mxu0 0.0
    %1115 = vmatpush1.msra.mxu0 0.0
    %1116 = vmatprep.subr.mxu0 0.0
    %1117 = vmatpush1.msra.mxu0 0.0
    %1118 = vmatprep.subr.mxu0 0.0
    %1119 = vmatpush1.msra.mxu0 0.0
    %1120 = vmatprep.subr.mxu0 0.0
    %1121 = vmatpush1.msra.mxu0 0.0
    %1122 = vmatprep.subr.mxu0 0.0
    %1123 = vmatpush1.msra.mxu0 0.0
    %1124 = vmatprep.subr.mxu0 0.0
    %1125 = vmatpush1.msra.mxu0 0.0
    %1126 = vmatprep.subr.mxu0 0.0
    %1127 = vmatpush1.msra.mxu0 0.0
    %1128 = vmatprep.subr.mxu0 0.0
    %1129 = vmatpush1.msra.mxu0 0.0
    %1130 = vmatprep.subr.mxu0 0.0
    %1131 = vmatpush1.msra.mxu0 0.0
    %1132 = vmatprep.subr.mxu0 0.0
    %1133 = vmatpush1.msra.mxu0 0.0
    %1134 = vmatprep.subr.mxu0 0.0
    %1135 = vmatpush1.msra.mxu0 0.0
    %1136 = vmatprep.subr.mxu0 0.0
    %1137 = vmatpush1.msra.mxu0 0.0
    %1138 = vmatprep.subr.mxu0 0.0
    %1139 = vmatpush1.msra.mxu0 0.0
    %1140 = vmatprep.subr.mxu0 0.0
    %1141 = vmatpush1.msra.mxu0 0.0
    %1142 = vmatprep.subr.mxu0 0.0
    %1143 = vmatpush1.msra.mxu0 0.0
    %1144 = vmatprep.subr.mxu0 0.0
    %1145 = vmatpush1.msra.mxu0 0.0
    %1146 = vmatprep.subr.mxu0 0.0
    %1147 = vmatpush1.msra.mxu0 0.0
    %1148 = vmatprep.subr.mxu0 0.0
    %1149 = vmatpush1.msra.mxu0 0.0
    %1150 = vmatprep.subr.mxu0 0.0
    %1151 = vmatpush1.msra.mxu0 0.0
    %1152 = vmatprep.subr.mxu0 0.0
    %1153 = vmatpush1.msra.mxu0 0.0
    %1154 = vmatprep.mubr.f32.mxu0 0.0
    %1155 = vmatmul.mubr.f32.gmra.mrb[0].mxu0 %v1018
    %v1156 = vpop.f32.mrb[0].mxu0
    %v1157 = vadd.f32 0.0, %v1156
    %v1158 = vpop.f32.mrb[0].mxu0
    %1159 = vdwg.mxu0
    %s1160 = scalar_lea.vmem %s0, 8
    %v1161 = vld [vmem:[%s1160] sm:$0x3]
    %v1162 = vadd.f32 %v1161, %v1087
    %v1163 = vxor.u32 %v1162, 2147483648
    %v1164 = vmul.f32 %v1163, 1.442695
    %v1165 = vpow.pop %v1164
    %v1166 = vadd.f32 %v1165, 1.0
    %v1167 = vrcp.pop %v1166
    %v1168 = vmul.f32 1.0, %v1167
    %s1169 = scalar_lea.vmem %s1, 8
    %v1170 = vld [vmem:[%s1169] sm:$0x3]
    %v1171 = vadd.f32 %v1170, %v1157
    %v1172 = vxor.u32 %v1171, 2147483648
    %v1173 = vmul.f32 %v1172, 1.442695
    %v1174 = vpow.pop %v1173
    %v1175 = vadd.f32 %v1174, 1.0
    %v1176 = vrcp.pop %v1175
    %v1177 = vmul.f32 1.0, %v1176
    %s1178 = scalar_lea.vmem %s2, 8
    %v1179 = vld [vmem:[%s1178] sm:$0x3]
    %1180 = vmatprep.subr.mxu0 0.0
    %1181 = vmatpush1.msra.mxu0 %v47
    %1182 = vmatprep.subr.mxu0 0.0
    %1183 = vmatpush1.msra.mxu0 %v48
    %1184 = vmatprep.subr.mxu0 0.0
    %1185 = vmatpush1.msra.mxu0 %v49
    %1186 = vmatprep.subr.mxu0 0.0
    %1187 = vmatpush1.msra.mxu0 %v50
    %1188 = vmatprep.subr.mxu0 0.0
    %1189 = vmatpush1.msra.mxu0 0.0
    %1190 = vmatprep.subr.mxu0 0.0
    %1191 = vmatpush1.msra.mxu0 0.0
    %1192 = vmatprep.subr.mxu0 0.0
    %1193 = vmatpush1.msra.mxu0 0.0
    %1194 = vmatprep.subr.mxu0 0.0
    %1195 = vmatpush1.msra.mxu0 0.0
    %1196 = vmatprep.subr.mxu0 0.0
    %1197 = vmatpush1.msra.mxu0 0.0
    %1198 = vmatprep.subr.mxu0 0.0
    %1199 = vmatpush1.msra.mxu0 0.0
    %1200 = vmatprep.subr.mxu0 0.0
    %1201 = vmatpush1.msra.mxu0 0.0
    %1202 = vmatprep.subr.mxu0 0.0
    %1203 = vmatpush1.msra.mxu0 0.0
    %1204 = vmatprep.subr.mxu0 0.0
    %1205 = vmatpush1.msra.mxu0 0.0
    %1206 = vmatprep.subr.mxu0 0.0
    %1207 = vmatpush1.msra.mxu0 0.0
    %1208 = vmatprep.subr.mxu0 0.0
    %1209 = vmatpush1.msra.mxu0 0.0
    %1210 = vmatprep.subr.mxu0 0.0
    %1211 = vmatpush1.msra.mxu0 0.0
    %1212 = vmatprep.subr.mxu0 0.0
    %1213 = vmatpush1.msra.mxu0 0.0
    %1214 = vmatprep.subr.mxu0 0.0
    %1215 = vmatpush1.msra.mxu0 0.0
    %1216 = vmatprep.subr.mxu0 0.0
    %1217 = vmatpush1.msra.mxu0 0.0
    %1218 = vmatprep.subr.mxu0 0.0
    %1219 = vmatpush1.msra.mxu0 0.0
    %1220 = vmatprep.subr.mxu0 0.0
    %1221 = vmatpush1.msra.mxu0 0.0
    %1222 = vmatprep.subr.mxu0 0.0
    %1223 = vmatpush1.msra.mxu0 0.0
    %1224 = vmatprep.subr.mxu0 0.0
    %1225 = vmatpush1.msra.mxu0 0.0
    %1226 = vmatprep.subr.mxu0 0.0
    %1227 = vmatpush1.msra.mxu0 0.0
    %1228 = vmatprep.subr.mxu0 0.0
    %1229 = vmatpush1.msra.mxu0 0.0
    %1230 = vmatprep.subr.mxu0 0.0
    %1231 = vmatpush1.msra.mxu0 0.0
    %1232 = vmatprep.subr.mxu0 0.0
    %1233 = vmatpush1.msra.mxu0 0.0
    %1234 = vmatprep.subr.mxu0 0.0
    %1235 = vmatpush1.msra.mxu0 0.0
    %1236 = vmatprep.subr.mxu0 0.0
    %1237 = vmatpush1.msra.mxu0 0.0
    %1238 = vmatprep.subr.mxu0 0.0
    %1239 = vmatpush1.msra.mxu0 0.0
    %1240 = vmatprep.subr.mxu0 0.0
    %1241 = vmatpush1.msra.mxu0 0.0
    %1242 = vmatprep.subr.mxu0 0.0
    %1243 = vmatpush1.msra.mxu0 0.0
    %1244 = vmatprep.mubr.f32.mxu0 0.0
    %1245 = vmatmul.mubr.f32.gmra.mrb[0].mxu0 %v1018
    %v1246 = vpop.f32.mrb[0].mxu0
    %v1247 = vadd.f32 %v56, %v1246
    %v1248 = vpop.f32.mrb[0].mxu0
    %1249 = vdwg.mxu0
    %v1250 = vmul.f32 %v1168, %v1247
    %v1251 = vadd.f32 %v1179, %v1250
    %v1252 = vtanh.pop %v1251
    %v1253 = vsub.f32 1.0, %v1177
    %v1254 = vmul.f32 %v1253, %v1252
    %v1255 = vmul.f32 %v1177, %v1016
    %v1256 = vadd.f32 %v1254, %v1255
    %v1258 = vsel %vm59, %v1256, 0
    %1260 = vmatprep.subr.mxu0 0.0
    %1261 = vmatpush1.msra.mxu0 %v39
    %1262 = vmatprep.subr.mxu0 0.0
    %1263 = vmatpush1.msra.mxu0 %v40
    %1264 = vmatprep.subr.mxu0 0.0
    %1265 = vmatpush1.msra.mxu0 %v41
    %1266 = vmatprep.subr.mxu0 0.0
    %1267 = vmatpush1.msra.mxu0 %v42
    %1268 = vmatprep.subr.mxu0 0.0
    %1269 = vmatpush1.msra.mxu0 0.0
    %1270 = vmatprep.subr.mxu0 0.0
    %1271 = vmatpush1.msra.mxu0 0.0
    %1272 = vmatprep.subr.mxu0 0.0
    %1273 = vmatpush1.msra.mxu0 0.0
    %1274 = vmatprep.subr.mxu0 0.0
    %1275 = vmatpush1.msra.mxu0 0.0
    %1276 = vmatprep.subr.mxu0 0.0
    %1277 = vmatpush1.msra.mxu0 0.0
    %1278 = vmatprep.subr.mxu0 0.0
    %1279 = vmatpush1.msra.mxu0 0.0
    %1280 = vmatprep.subr.mxu0 0.0
    %1281 = vmatpush1.msra.mxu0 0.0
    %1282 = vmatprep.subr.mxu0 0.0
    %1283 = vmatpush1.msra.mxu0 0.0
    %1284 = vmatprep.subr.mxu0 0.0
    %1285 = vmatpush1.msra.mxu0 0.0
    %1286 = vmatprep.subr.mxu0 0.0
    %1287 = vmatpush1.msra.mxu0 0.0
    %1288 = vmatprep.subr.mxu0 0.0
    %1289 = vmatpush1.msra.mxu0 0.0
    %1290 = vmatprep.subr.mxu0 0.0
    %1291 = vmatpush1.msra.mxu0 0.0
    %1292 = vmatprep.subr.mxu0 0.0
    %1293 = vmatpush1.msra.mxu0 0.0
    %1294 = vmatprep.subr.mxu0 0.0
    %1295 = vmatpush1.msra.mxu0 0.0
    %1296 = vmatprep.subr.mxu0 0.0
    %1297 = vmatpush1.msra.mxu0 0.0
    %1298 = vmatprep.subr.mxu0 0.0
    %1299 = vmatpush1.msra.mxu0 0.0
    %1300 = vmatprep.subr.mxu0 0.0
    %1301 = vmatpush1.msra.mxu0 0.0
    %1302 = vmatprep.subr.mxu0 0.0
    %1303 = vmatpush1.msra.mxu0 0.0
    %1304 = vmatprep.subr.mxu0 0.0
    %1305 = vmatpush1.msra.mxu0 0.0
    %1306 = vmatprep.subr.mxu0 0.0
    %1307 = vmatpush1.msra.mxu0 0.0
    %1308 = vmatprep.subr.mxu0 0.0
    %1309 = vmatpush1.msra.mxu0 0.0
    %1310 = vmatprep.subr.mxu0 0.0
    %1311 = vmatpush1.msra.mxu0 0.0
    %1312 = vmatprep.subr.mxu0 0.0
    %1313 = vmatpush1.msra.mxu0 0.0
    %1314 = vmatprep.subr.mxu0 0.0
    %1315 = vmatpush1.msra.mxu0 0.0
    %1316 = vmatprep.subr.mxu0 0.0
    %1317 = vmatpush1.msra.mxu0 0.0
    %1318 = vmatprep.subr.mxu0 0.0
    %1319 = vmatpush1.msra.mxu0 0.0
    %1320 = vmatprep.subr.mxu0 0.0
    %1321 = vmatpush1.msra.mxu0 0.0
    %1322 = vmatprep.subr.mxu0 0.0
    %1323 = vmatpush1.msra.mxu0 0.0
    %1324 = vmatprep.mubr.f32.mxu0 0.0
    %1325 = vmatmul.mubr.f32.gmra.mrb[0].mxu0 %v1258
    %v1326 = vpop.f32.mrb[0].mxu0
    %v1327 = vadd.f32 0.0, %v1326
    %v1328 = vpop.f32.mrb[0].mxu0
    %1329 = vdwg.mxu0
    %1330 = vmatprep.subr.mxu0 0.0
    %1331 = vmatpush1.msra.mxu0 %v43
    %1332 = vmatprep.subr.mxu0 0.0
    %1333 = vmatpush1.msra.mxu0 %v44
    %1334 = vmatprep.subr.mxu0 0.0
    %1335 = vmatpush1.msra.mxu0 %v45
    %1336 = vmatprep.subr.mxu0 0.0
    %1337 = vmatpush1.msra.mxu0 %v46
    %1338 = vmatprep.subr.mxu0 0.0
    %1339 = vmatpush1.msra.mxu0 0.0
    %1340 = vmatprep.subr.mxu0 0.0
    %1341 = vmatpush1.msra.mxu0 0.0
    %1342 = vmatprep.subr.mxu0 0.0
    %1343 = vmatpush1.msra.mxu0 0.0
    %1344 = vmatprep.subr.mxu0 0.0
    %1345 = vmatpush1.msra.mxu0 0.0
    %1346 = vmatprep.subr.mxu0 0.0
    %1347 = vmatpush1.msra.mxu0 0.0
    %1348 = vmatprep.subr.mxu0 0.0
    %1349 = vmatpush1.msra.mxu0 0.0
    %1350 = vmatprep.subr.mxu0 0.0
    %1351 = vmatpush1.msra.mxu0 0.0
    %1352 = vmatprep.subr.mxu0 0.0
    %1353 = vmatpush1.msra.mxu0 0.0
    %1354 = vmatprep.subr.mxu0 0.0
    %1355 = vmatpush1.msra.mxu0 0.0
    %1356 = vmatprep.subr.mxu0 0.0
    %1357 = vmatpush1.msra.mxu0 0.0
    %1358 = vmatprep.subr.mxu0 0.0
    %1359 = vmatpush1.msra.mxu0 0.0
    %1360 = vmatprep.subr.mxu0 0.0
    %1361 = vmatpush1.msra.mxu0 0.0
    %1362 = vmatprep.subr.mxu0 0.0
    %1363 = vmatpush1.msra.mxu0 0.0
    %1364 = vmatprep.subr.mxu0 0.0
    %1365 = vmatpush1.msra.mxu0 0.0
    %1366 = vmatprep.subr.mxu0 0.0
    %1367 = vmatpush1.msra.mxu0 0.0
    %1368 = vmatprep.subr.mxu0 0.0
    %1369 = vmatpush1.msra.mxu0 0.0
    %1370 = vmatprep.subr.mxu0 0.0
    %1371 = vmatpush1.msra.mxu0 0.0
    %1372 = vmatprep.subr.mxu0 0.0
    %1373 = vmatpush1.msra.mxu0 0.0
    %1374 = vmatprep.subr.mxu0 0.0
    %1375 = vmatpush1.msra.mxu0 0.0
    %1376 = vmatprep.subr.mxu0 0.0
    %1377 = vmatpush1.msra.mxu0 0.0
    %1378 = vmatprep.subr.mxu0 0.0
    %1379 = vmatpush1.msra.mxu0 0.0
    %1380 = vmatprep.subr.mxu0 0.0
    %1381 = vmatpush1.msra.mxu0 0.0
    %1382 = vmatprep.subr.mxu0 0.0
    %1383 = vmatpush1.msra.mxu0 0.0
    %1384 = vmatprep.subr.mxu0 0.0
    %1385 = vmatpush1.msra.mxu0 0.0
    %1386 = vmatprep.subr.mxu0 0.0
    %1387 = vmatpush1.msra.mxu0 0.0
    %1388 = vmatprep.subr.mxu0 0.0
    %1389 = vmatpush1.msra.mxu0 0.0
    %1390 = vmatprep.subr.mxu0 0.0
    %1391 = vmatpush1.msra.mxu0 0.0
    %1392 = vmatprep.subr.mxu0 0.0
    %1393 = vmatpush1.msra.mxu0 0.0
    %1394 = vmatprep.mubr.f32.mxu0 0.0
    %1395 = vmatmul.mubr.f32.gmra.mrb[0].mxu0 %v1258
    %v1396 = vpop.f32.mrb[0].mxu0
    %v1397 = vadd.f32 0.0, %v1396
    %v1398 = vpop.f32.mrb[0].mxu0
    %1399 = vdwg.mxu0
    %s1400 = scalar_lea.vmem %s0, 10
    %v1401 = vld [vmem:[%s1400] sm:$0x3]
    %v1402 = vadd.f32 %v1401, %v1327
    %v1403 = vxor.u32 %v1402, 2147483648
    %v1404 = vmul.f32 %v1403, 1.442695
    %v1405 = vpow.pop %v1404
    %v1406 = vadd.f32 %v1405, 1.0
    %v1407 = vrcp.pop %v1406
    %v1408 = vmul.f32 1.0, %v1407
    %s1409 = scalar_lea.vmem %s1, 10
    %v1410 = vld [vmem:[%s1409] sm:$0x3]
    %v1411 = vadd.f32 %v1410, %v1397
    %v1412 = vxor.u32 %v1411, 2147483648
    %v1413 = vmul.f32 %v1412, 1.442695
    %v1414 = vpow.pop %v1413
    %v1415 = vadd.f32 %v1414, 1.0
    %v1416 = vrcp.pop %v1415
    %v1417 = vmul.f32 1.0, %v1416
    %s1418 = scalar_lea.vmem %s2, 10
    %v1419 = vld [vmem:[%s1418] sm:$0x3]
    %1420 = vmatprep.subr.mxu0 0.0
    %1421 = vmatpush1.msra.mxu0 %v47
    %1422 = vmatprep.subr.mxu0 0.0
    %1423 = vmatpush1.msra.mxu0 %v48
    %1424 = vmatprep.subr.mxu0 0.0
    %1425 = vmatpush1.msra.mxu0 %v49
    %1426 = vmatprep.subr.mxu0 0.0
    %1427 = vmatpush1.msra.mxu0 %v50
    %1428 = vmatprep.subr.mxu0 0.0
    %1429 = vmatpush1.msra.mxu0 0.0
    %1430 = vmatprep.subr.mxu0 0.0
    %1431 = vmatpush1.msra.mxu0 0.0
    %1432 = vmatprep.subr.mxu0 0.0
    %1433 = vmatpush1.msra.mxu0 0.0
    %1434 = vmatprep.subr.mxu0 0.0
    %1435 = vmatpush1.msra.mxu0 0.0
    %1436 = vmatprep.subr.mxu0 0.0
    %1437 = vmatpush1.msra.mxu0 0.0
    %1438 = vmatprep.subr.mxu0 0.0
    %1439 = vmatpush1.msra.mxu0 0.0
    %1440 = vmatprep.subr.mxu0 0.0
    %1441 = vmatpush1.msra.mxu0 0.0
    %1442 = vmatprep.subr.mxu0 0.0
    %1443 = vmatpush1.msra.mxu0 0.0
    %1444 = vmatprep.subr.mxu0 0.0
    %1445 = vmatpush1.msra.mxu0 0.0
    %1446 = vmatprep.subr.mxu0 0.0
    %1447 = vmatpush1.msra.mxu0 0.0
    %1448 = vmatprep.subr.mxu0 0.0
    %1449 = vmatpush1.msra.mxu0 0.0
    %1450 = vmatprep.subr.mxu0 0.0
    %1451 = vmatpush1.msra.mxu0 0.0
    %1452 = vmatprep.subr.mxu0 0.0
    %1453 = vmatpush1.msra.mxu0 0.0
    %1454 = vmatprep.subr.mxu0 0.0
    %1455 = vmatpush1.msra.mxu0 0.0
    %1456 = vmatprep.subr.mxu0 0.0
    %1457 = vmatpush1.msra.mxu0 0.0
    %1458 = vmatprep.subr.mxu0 0.0
    %1459 = vmatpush1.msra.mxu0 0.0
    %1460 = vmatprep.subr.mxu0 0.0
    %1461 = vmatpush1.msra.mxu0 0.0
    %1462 = vmatprep.subr.mxu0 0.0
    %1463 = vmatpush1.msra.mxu0 0.0
    %1464 = vmatprep.subr.mxu0 0.0
    %1465 = vmatpush1.msra.mxu0 0.0
    %1466 = vmatprep.subr.mxu0 0.0
    %1467 = vmatpush1.msra.mxu0 0.0
    %1468 = vmatprep.subr.mxu0 0.0
    %1469 = vmatpush1.msra.mxu0 0.0
    %1470 = vmatprep.subr.mxu0 0.0
    %1471 = vmatpush1.msra.mxu0 0.0
    %1472 = vmatprep.subr.mxu0 0.0
    %1473 = vmatpush1.msra.mxu0 0.0
    %1474 = vmatprep.subr.mxu0 0.0
    %1475 = vmatpush1.msra.mxu0 0.0
    %1476 = vmatprep.subr.mxu0 0.0
    %1477 = vmatpush1.msra.mxu0 0.0
    %1478 = vmatprep.subr.mxu0 0.0
    %1479 = vmatpush1.msra.mxu0 0.0
    %1480 = vmatprep.subr.mxu0 0.0
    %1481 = vmatpush1.msra.mxu0 0.0
    %1482 = vmatprep.subr.mxu0 0.0
    %1483 = vmatpush1.msra.mxu0 0.0
    %1484 = vmatprep.mubr.f32.mxu0 0.0
    %1485 = vmatmul.mubr.f32.gmra.mrb[0].mxu0 %v1258
    %v1486 = vpop.f32.mrb[0].mxu0
    %v1487 = vadd.f32 %v56, %v1486
    %v1488 = vpop.f32.mrb[0].mxu0
    %1489 = vdwg.mxu0
    %v1490 = vmul.f32 %v1408, %v1487
    %v1491 = vadd.f32 %v1419, %v1490
    %v1492 = vtanh.pop %v1491
    %v1493 = vsub.f32 1.0, %v1417
    %v1494 = vmul.f32 %v1493, %v1492
    %v1495 = vmul.f32 %v1417, %v1256
    %v1496 = vadd.f32 %v1494, %v1495
    %v1498 = vsel %vm59, %v1496, 0
    %1500 = vmatprep.subr.mxu0 0.0
    %1501 = vmatpush1.msra.mxu0 %v39
    %1502 = vmatprep.subr.mxu0 0.0
    %1503 = vmatpush1.msra.mxu0 %v40
    %1504 = vmatprep.subr.mxu0 0.0
    %1505 = vmatpush1.msra.mxu0 %v41
    %1506 = vmatprep.subr.mxu0 0.0
    %1507 = vmatpush1.msra.mxu0 %v42
    %1508 = vmatprep.subr.mxu0 0.0
    %1509 = vmatpush1.msra.mxu0 0.0
    %1510 = vmatprep.subr.mxu0 0.0
    %1511 = vmatpush1.msra.mxu0 0.0
    %1512 = vmatprep.subr.mxu0 0.0
    %1513 = vmatpush1.msra.mxu0 0.0
    %1514 = vmatprep.subr.mxu0 0.0
    %1515 = vmatpush1.msra.mxu0 0.0
    %1516 = vmatprep.subr.mxu0 0.0
    %1517 = vmatpush1.msra.mxu0 0.0
    %1518 = vmatprep.subr.mxu0 0.0
    %1519 = vmatpush1.msra.mxu0 0.0
    %1520 = vmatprep.subr.mxu0 0.0
    %1521 = vmatpush1.msra.mxu0 0.0
    %1522 = vmatprep.subr.mxu0 0.0
    %1523 = vmatpush1.msra.mxu0 0.0
    %1524 = vmatprep.subr.mxu0 0.0
    %1525 = vmatpush1.msra.mxu0 0.0
    %1526 = vmatprep.subr.mxu0 0.0
    %1527 = vmatpush1.msra.mxu0 0.0
    %1528 = vmatprep.subr.mxu0 0.0
    %1529 = vmatpush1.msra.mxu0 0.0
    %1530 = vmatprep.subr.mxu0 0.0
    %1531 = vmatpush1.msra.mxu0 0.0
    %1532 = vmatprep.subr.mxu0 0.0
    %1533 = vmatpush1.msra.mxu0 0.0
    %1534 = vmatprep.subr.mxu0 0.0
    %1535 = vmatpush1.msra.mxu0 0.0
    %1536 = vmatprep.subr.mxu0 0.0
    %1537 = vmatpush1.msra.mxu0 0.0
    %1538 = vmatprep.subr.mxu0 0.0
    %1539 = vmatpush1.msra.mxu0 0.0
    %1540 = vmatprep.subr.mxu0 0.0
    %1541 = vmatpush1.msra.mxu0 0.0
    %1542 = vmatprep.subr.mxu0 0.0
    %1543 = vmatpush1.msra.mxu0 0.0
    %1544 = vmatprep.subr.mxu0 0.0
    %1545 = vmatpush1.msra.mxu0 0.0
    %1546 = vmatprep.subr.mxu0 0.0
    %1547 = vmatpush1.msra.mxu0 0.0
    %1548 = vmatprep.subr.mxu0 0.0
    %1549 = vmatpush1.msra.mxu0 0.0
    %1550 = vmatprep.subr.mxu0 0.0
    %1551 = vmatpush1.msra.mxu0 0.0
    %1552 = vmatprep.subr.mxu0 0.0
    %1553 = vmatpush1.msra.mxu0 0.0
    %1554 = vmatprep.subr.mxu0 0.0
    %1555 = vmatpush1.msra.mxu0 0.0
    %1556 = vmatprep.subr.mxu0 0.0
    %1557 = vmatpush1.msra.mxu0 0.0
    %1558 = vmatprep.subr.mxu0 0.0
    %1559 = vmatpush1.msra.mxu0 0.0
    %1560 = vmatprep.subr.mxu0 0.0
    %1561 = vmatpush1.msra.mxu0 0.0
    %1562 = vmatprep.subr.mxu0 0.0
    %1563 = vmatpush1.msra.mxu0 0.0
    %1564 = vmatprep.mubr.f32.mxu0 0.0
    %1565 = vmatmul.mubr.f32.gmra.mrb[0].mxu0 %v1498
    %v1566 = vpop.f32.mrb[0].mxu0
    %v1567 = vadd.f32 0.0, %v1566
    %v1568 = vpop.f32.mrb[0].mxu0
    %1569 = vdwg.mxu0
    %1570 = vmatprep.subr.mxu0 0.0
    %1571 = vmatpush1.msra.mxu0 %v43
    %1572 = vmatprep.subr.mxu0 0.0
    %1573 = vmatpush1.msra.mxu0 %v44
    %1574 = vmatprep.subr.mxu0 0.0
    %1575 = vmatpush1.msra.mxu0 %v45
    %1576 = vmatprep.subr.mxu0 0.0
    %1577 = vmatpush1.msra.mxu0 %v46
    %1578 = vmatprep.subr.mxu0 0.0
    %1579 = vmatpush1.msra.mxu0 0.0
    %1580 = vmatprep.subr.mxu0 0.0
    %1581 = vmatpush1.msra.mxu0 0.0
    %1582 = vmatprep.subr.mxu0 0.0
    %1583 = vmatpush1.msra.mxu0 0.0
    %1584 = vmatprep.subr.mxu0 0.0
    %1585 = vmatpush1.msra.mxu0 0.0
    %1586 = vmatprep.subr.mxu0 0.0
    %1587 = vmatpush1.msra.mxu0 0.0
    %1588 = vmatprep.subr.mxu0 0.0
    %1589 = vmatpush1.msra.mxu0 0.0
    %1590 = vmatprep.subr.mxu0 0.0
    %1591 = vmatpush1.msra.mxu0 0.0
    %1592 = vmatprep.subr.mxu0 0.0
    %1593 = vmatpush1.msra.mxu0 0.0
    %1594 = vmatprep.subr.mxu0 0.0
    %1595 = vmatpush1.msra.mxu0 0.0
    %1596 = vmatprep.subr.mxu0 0.0
    %1597 = vmatpush1.msra.mxu0 0.0
    %1598 = vmatprep.subr.mxu0 0.0
    %1599 = vmatpush1.msra.mxu0 0.0
    %1600 = vmatprep.subr.mxu0 0.0
    %1601 = vmatpush1.msra.mxu0 0.0
    %1602 = vmatprep.subr.mxu0 0.0
    %1603 = vmatpush1.msra.mxu0 0.0
    %1604 = vmatprep.subr.mxu0 0.0
    %1605 = vmatpush1.msra.mxu0 0.0
    %1606 = vmatprep.subr.mxu0 0.0
    %1607 = vmatpush1.msra.mxu0 0.0
    %1608 = vmatprep.subr.mxu0 0.0
    %1609 = vmatpush1.msra.mxu0 0.0
    %1610 = vmatprep.subr.mxu0 0.0
    %1611 = vmatpush1.msra.mxu0 0.0
    %1612 = vmatprep.subr.mxu0 0.0
    %1613 = vmatpush1.msra.mxu0 0.0
    %1614 = vmatprep.subr.mxu0 0.0
    %1615 = vmatpush1.msra.mxu0 0.0
    %1616 = vmatprep.subr.mxu0 0.0
    %1617 = vmatpush1.msra.mxu0 0.0
    %1618 = vmatprep.subr.mxu0 0.0
    %1619 = vmatpush1.msra.mxu0 0.0
    %1620 = vmatprep.subr.mxu0 0.0
    %1621 = vmatpush1.msra.mxu0 0.0
    %1622 = vmatprep.subr.mxu0 0.0
    %1623 = vmatpush1.msra.mxu0 0.0
    %1624 = vmatprep.subr.mxu0 0.0
    %1625 = vmatpush1.msra.mxu0 0.0
    %1626 = vmatprep.subr.mxu0 0.0
    %1627 = vmatpush1.msra.mxu0 0.0
    %1628 = vmatprep.subr.mxu0 0.0
    %1629 = vmatpush1.msra.mxu0 0.0
    %1630 = vmatprep.subr.mxu0 0.0
    %1631 = vmatpush1.msra.mxu0 0.0
    %1632 = vmatprep.subr.mxu0 0.0
    %1633 = vmatpush1.msra.mxu0 0.0
    %1634 = vmatprep.mubr.f32.mxu0 0.0
    %1635 = vmatmul.mubr.f32.gmra.mrb[0].mxu0 %v1498
    %v1636 = vpop.f32.mrb[0].mxu0
    %v1637 = vadd.f32 0.0, %v1636
    %v1638 = vpop.f32.mrb[0].mxu0
    %1639 = vdwg.mxu0
    %s1640 = scalar_lea.vmem %s0, 12
    %v1641 = vld [vmem:[%s1640] sm:$0x3]
    %v1642 = vadd.f32 %v1641, %v1567
    %v1643 = vxor.u32 %v1642, 2147483648
    %v1644 = vmul.f32 %v1643, 1.442695
    %v1645 = vpow.pop %v1644
    %v1646 = vadd.f32 %v1645, 1.0
    %v1647 = vrcp.pop %v1646
    %v1648 = vmul.f32 1.0, %v1647
    %s1649 = scalar_lea.vmem %s1, 12
    %v1650 = vld [vmem:[%s1649] sm:$0x3]
    %v1651 = vadd.f32 %v1650, %v1637
    %v1652 = vxor.u32 %v1651, 2147483648
    %v1653 = vmul.f32 %v1652, 1.442695
    %v1654 = vpow.pop %v1653
    %v1655 = vadd.f32 %v1654, 1.0
    %v1656 = vrcp.pop %v1655
    %v1657 = vmul.f32 1.0, %v1656
    %s1658 = scalar_lea.vmem %s2, 12
    %v1659 = vld [vmem:[%s1658] sm:$0x3]
    %1660 = vmatprep.subr.mxu0 0.0
    %1661 = vmatpush1.msra.mxu0 %v47
    %1662 = vmatprep.subr.mxu0 0.0
    %1663 = vmatpush1.msra.mxu0 %v48
    %1664 = vmatprep.subr.mxu0 0.0
    %1665 = vmatpush1.msra.mxu0 %v49
    %1666 = vmatprep.subr.mxu0 0.0
    %1667 = vmatpush1.msra.mxu0 %v50
    %1668 = vmatprep.subr.mxu0 0.0
    %1669 = vmatpush1.msra.mxu0 0.0
    %1670 = vmatprep.subr.mxu0 0.0
    %1671 = vmatpush1.msra.mxu0 0.0
    %1672 = vmatprep.subr.mxu0 0.0
    %1673 = vmatpush1.msra.mxu0 0.0
    %1674 = vmatprep.subr.mxu0 0.0
    %1675 = vmatpush1.msra.mxu0 0.0
    %1676 = vmatprep.subr.mxu0 0.0
    %1677 = vmatpush1.msra.mxu0 0.0
    %1678 = vmatprep.subr.mxu0 0.0
    %1679 = vmatpush1.msra.mxu0 0.0
    %1680 = vmatprep.subr.mxu0 0.0
    %1681 = vmatpush1.msra.mxu0 0.0
    %1682 = vmatprep.subr.mxu0 0.0
    %1683 = vmatpush1.msra.mxu0 0.0
    %1684 = vmatprep.subr.mxu0 0.0
    %1685 = vmatpush1.msra.mxu0 0.0
    %1686 = vmatprep.subr.mxu0 0.0
    %1687 = vmatpush1.msra.mxu0 0.0
    %1688 = vmatprep.subr.mxu0 0.0
    %1689 = vmatpush1.msra.mxu0 0.0
    %1690 = vmatprep.subr.mxu0 0.0
    %1691 = vmatpush1.msra.mxu0 0.0
    %1692 = vmatprep.subr.mxu0 0.0
    %1693 = vmatpush1.msra.mxu0 0.0
    %1694 = vmatprep.subr.mxu0 0.0
    %1695 = vmatpush1.msra.mxu0 0.0
    %1696 = vmatprep.subr.mxu0 0.0
    %1697 = vmatpush1.msra.mxu0 0.0
    %1698 = vmatprep.subr.mxu0 0.0
    %1699 = vmatpush1.msra.mxu0 0.0
    %1700 = vmatprep.subr.mxu0 0.0
    %1701 = vmatpush1.msra.mxu0 0.0
    %1702 = vmatprep.subr.mxu0 0.0
    %1703 = vmatpush1.msra.mxu0 0.0
    %1704 = vmatprep.subr.mxu0 0.0
    %1705 = vmatpush1.msra.mxu0 0.0
    %1706 = vmatprep.subr.mxu0 0.0
    %1707 = vmatpush1.msra.mxu0 0.0
    %1708 = vmatprep.subr.mxu0 0.0
    %1709 = vmatpush1.msra.mxu0 0.0
    %1710 = vmatprep.subr.mxu0 0.0
    %1711 = vmatpush1.msra.mxu0 0.0
    %1712 = vmatprep.subr.mxu0 0.0
    %1713 = vmatpush1.msra.mxu0 0.0
    %1714 = vmatprep.subr.mxu0 0.0
    %1715 = vmatpush1.msra.mxu0 0.0
    %1716 = vmatprep.subr.mxu0 0.0
    %1717 = vmatpush1.msra.mxu0 0.0
    %1718 = vmatprep.subr.mxu0 0.0
    %1719 = vmatpush1.msra.mxu0 0.0
    %1720 = vmatprep.subr.mxu0 0.0
    %1721 = vmatpush1.msra.mxu0 0.0
    %1722 = vmatprep.subr.mxu0 0.0
    %1723 = vmatpush1.msra.mxu0 0.0
    %1724 = vmatprep.mubr.f32.mxu0 0.0
    %1725 = vmatmul.mubr.f32.gmra.mrb[0].mxu0 %v1498
    %v1726 = vpop.f32.mrb[0].mxu0
    %v1727 = vadd.f32 %v56, %v1726
    %v1728 = vpop.f32.mrb[0].mxu0
    %1729 = vdwg.mxu0
    %v1730 = vmul.f32 %v1648, %v1727
    %v1731 = vadd.f32 %v1659, %v1730
    %v1732 = vtanh.pop %v1731
    %v1733 = vsub.f32 1.0, %v1657
    %v1734 = vmul.f32 %v1733, %v1732
    %v1735 = vmul.f32 %v1657, %v1496
    %v1736 = vadd.f32 %v1734, %v1735
    %v1738 = vsel %vm59, %v1736, 0
    %1740 = vmatprep.subr.mxu0 0.0
    %1741 = vmatpush1.msra.mxu0 %v39
    %1742 = vmatprep.subr.mxu0 0.0
    %1743 = vmatpush1.msra.mxu0 %v40
    %1744 = vmatprep.subr.mxu0 0.0
    %1745 = vmatpush1.msra.mxu0 %v41
    %1746 = vmatprep.subr.mxu0 0.0
    %1747 = vmatpush1.msra.mxu0 %v42
    %1748 = vmatprep.subr.mxu0 0.0
    %1749 = vmatpush1.msra.mxu0 0.0
    %1750 = vmatprep.subr.mxu0 0.0
    %1751 = vmatpush1.msra.mxu0 0.0
    %1752 = vmatprep.subr.mxu0 0.0
    %1753 = vmatpush1.msra.mxu0 0.0
    %1754 = vmatprep.subr.mxu0 0.0
    %1755 = vmatpush1.msra.mxu0 0.0
    %1756 = vmatprep.subr.mxu0 0.0
    %1757 = vmatpush1.msra.mxu0 0.0
    %1758 = vmatprep.subr.mxu0 0.0
    %1759 = vmatpush1.msra.mxu0 0.0
    %1760 = vmatprep.subr.mxu0 0.0
    %1761 = vmatpush1.msra.mxu0 0.0
    %1762 = vmatprep.subr.mxu0 0.0
    %1763 = vmatpush1.msra.mxu0 0.0
    %1764 = vmatprep.subr.mxu0 0.0
    %1765 = vmatpush1.msra.mxu0 0.0
    %1766 = vmatprep.subr.mxu0 0.0
    %1767 = vmatpush1.msra.mxu0 0.0
    %1768 = vmatprep.subr.mxu0 0.0
    %1769 = vmatpush1.msra.mxu0 0.0
    %1770 = vmatprep.subr.mxu0 0.0
    %1771 = vmatpush1.msra.mxu0 0.0
    %1772 = vmatprep.subr.mxu0 0.0
    %1773 = vmatpush1.msra.mxu0 0.0
    %1774 = vmatprep.subr.mxu0 0.0
    %1775 = vmatpush1.msra.mxu0 0.0
    %1776 = vmatprep.subr.mxu0 0.0
    %1777 = vmatpush1.msra.mxu0 0.0
    %1778 = vmatprep.subr.mxu0 0.0
    %1779 = vmatpush1.msra.mxu0 0.0
    %1780 = vmatprep.subr.mxu0 0.0
    %1781 = vmatpush1.msra.mxu0 0.0
    %1782 = vmatprep.subr.mxu0 0.0
    %1783 = vmatpush1.msra.mxu0 0.0
    %1784 = vmatprep.subr.mxu0 0.0
    %1785 = vmatpush1.msra.mxu0 0.0
    %1786 = vmatprep.subr.mxu0 0.0
    %1787 = vmatpush1.msra.mxu0 0.0
    %1788 = vmatprep.subr.mxu0 0.0
    %1789 = vmatpush1.msra.mxu0 0.0
    %1790 = vmatprep.subr.mxu0 0.0
    %1791 = vmatpush1.msra.mxu0 0.0
    %1792 = vmatprep.subr.mxu0 0.0
    %1793 = vmatpush1.msra.mxu0 0.0
    %1794 = vmatprep.subr.mxu0 0.0
    %1795 = vmatpush1.msra.mxu0 0.0
    %1796 = vmatprep.subr.mxu0 0.0
    %1797 = vmatpush1.msra.mxu0 0.0
    %1798 = vmatprep.subr.mxu0 0.0
    %1799 = vmatpush1.msra.mxu0 0.0
    %1800 = vmatprep.subr.mxu0 0.0
    %1801 = vmatpush1.msra.mxu0 0.0
    %1802 = vmatprep.subr.mxu0 0.0
    %1803 = vmatpush1.msra.mxu0 0.0
    %1804 = vmatprep.mubr.f32.mxu0 0.0
    %1805 = vmatmul.mubr.f32.gmra.mrb[0].mxu0 %v1738
    %v1806 = vpop.f32.mrb[0].mxu0
    %v1807 = vadd.f32 0.0, %v1806
    %v1808 = vpop.f32.mrb[0].mxu0
    %1809 = vdwg.mxu0
    %1810 = vmatprep.subr.mxu0 0.0
    %1811 = vmatpush1.msra.mxu0 %v43
    %1812 = vmatprep.subr.mxu0 0.0
    %1813 = vmatpush1.msra.mxu0 %v44
    %1814 = vmatprep.subr.mxu0 0.0
    %1815 = vmatpush1.msra.mxu0 %v45
    %1816 = vmatprep.subr.mxu0 0.0
    %1817 = vmatpush1.msra.mxu0 %v46
    %1818 = vmatprep.subr.mxu0 0.0
    %1819 = vmatpush1.msra.mxu0 0.0
    %1820 = vmatprep.subr.mxu0 0.0
    %1821 = vmatpush1.msra.mxu0 0.0
    %1822 = vmatprep.subr.mxu0 0.0
    %1823 = vmatpush1.msra.mxu0 0.0
    %1824 = vmatprep.subr.mxu0 0.0
    %1825 = vmatpush1.msra.mxu0 0.0
    %1826 = vmatprep.subr.mxu0 0.0
    %1827 = vmatpush1.msra.mxu0 0.0
    %1828 = vmatprep.subr.mxu0 0.0
    %1829 = vmatpush1.msra.mxu0 0.0
    %1830 = vmatprep.subr.mxu0 0.0
    %1831 = vmatpush1.msra.mxu0 0.0
    %1832 = vmatprep.subr.mxu0 0.0
    %1833 = vmatpush1.msra.mxu0 0.0
    %1834 = vmatprep.subr.mxu0 0.0
    %1835 = vmatpush1.msra.mxu0 0.0
    %1836 = vmatprep.subr.mxu0 0.0
    %1837 = vmatpush1.msra.mxu0 0.0
    %1838 = vmatprep.subr.mxu0 0.0
    %1839 = vmatpush1.msra.mxu0 0.0
    %1840 = vmatprep.subr.mxu0 0.0
    %1841 = vmatpush1.msra.mxu0 0.0
    %1842 = vmatprep.subr.mxu0 0.0
    %1843 = vmatpush1.msra.mxu0 0.0
    %1844 = vmatprep.subr.mxu0 0.0
    %1845 = vmatpush1.msra.mxu0 0.0
    %1846 = vmatprep.subr.mxu0 0.0
    %1847 = vmatpush1.msra.mxu0 0.0
    %1848 = vmatprep.subr.mxu0 0.0
    %1849 = vmatpush1.msra.mxu0 0.0
    %1850 = vmatprep.subr.mxu0 0.0
    %1851 = vmatpush1.msra.mxu0 0.0
    %1852 = vmatprep.subr.mxu0 0.0
    %1853 = vmatpush1.msra.mxu0 0.0
    %1854 = vmatprep.subr.mxu0 0.0
    %1855 = vmatpush1.msra.mxu0 0.0
    %1856 = vmatprep.subr.mxu0 0.0
    %1857 = vmatpush1.msra.mxu0 0.0
    %1858 = vmatprep.subr.mxu0 0.0
    %1859 = vmatpush1.msra.mxu0 0.0
    %1860 = vmatprep.subr.mxu0 0.0
    %1861 = vmatpush1.msra.mxu0 0.0
    %1862 = vmatprep.subr.mxu0 0.0
    %1863 = vmatpush1.msra.mxu0 0.0
    %1864 = vmatprep.subr.mxu0 0.0
    %1865 = vmatpush1.msra.mxu0 0.0
    %1866 = vmatprep.subr.mxu0 0.0
    %1867 = vmatpush1.msra.mxu0 0.0
    %1868 = vmatprep.subr.mxu0 0.0
    %1869 = vmatpush1.msra.mxu0 0.0
    %1870 = vmatprep.subr.mxu0 0.0
    %1871 = vmatpush1.msra.mxu0 0.0
    %1872 = vmatprep.subr.mxu0 0.0
    %1873 = vmatpush1.msra.mxu0 0.0
    %1874 = vmatprep.mubr.f32.mxu0 0.0
    %1875 = vmatmul.mubr.f32.gmra.mrb[0].mxu0 %v1738
    %v1876 = vpop.f32.mrb[0].mxu0
    %v1877 = vadd.f32 0.0, %v1876
    %v1878 = vpop.f32.mrb[0].mxu0
    %1879 = vdwg.mxu0
    %s1880 = scalar_lea.vmem %s0, 14
    %v1881 = vld [vmem:[%s1880] sm:$0x3]
    %v1882 = vadd.f32 %v1881, %v1807
    %v1883 = vxor.u32 %v1882, 2147483648
    %v1884 = vmul.f32 %v1883, 1.442695
    %v1885 = vpow.pop %v1884
    %v1886 = vadd.f32 %v1885, 1.0
    %v1887 = vrcp.pop %v1886
    %v1888 = vmul.f32 1.0, %v1887
    %s1889 = scalar_lea.vmem %s1, 14
    %v1890 = vld [vmem:[%s1889] sm:$0x3]
    %v1891 = vadd.f32 %v1890, %v1877
    %v1892 = vxor.u32 %v1891, 2147483648
    %v1893 = vmul.f32 %v1892, 1.442695
    %v1894 = vpow.pop %v1893
    %v1895 = vadd.f32 %v1894, 1.0
    %v1896 = vrcp.pop %v1895
    %v1897 = vmul.f32 1.0, %v1896
    %s1898 = scalar_lea.vmem %s2, 14
    %v1899 = vld [vmem:[%s1898] sm:$0x3]
    %1900 = vmatprep.subr.mxu0 0.0
    %1901 = vmatpush1.msra.mxu0 %v47
    %1902 = vmatprep.subr.mxu0 0.0
    %1903 = vmatpush1.msra.mxu0 %v48
    %1904 = vmatprep.subr.mxu0 0.0
    %1905 = vmatpush1.msra.mxu0 %v49
    %1906 = vmatprep.subr.mxu0 0.0
    %1907 = vmatpush1.msra.mxu0 %v50
    %1908 = vmatprep.subr.mxu0 0.0
    %1909 = vmatpush1.msra.mxu0 0.0
    %1910 = vmatprep.subr.mxu0 0.0
    %1911 = vmatpush1.msra.mxu0 0.0
    %1912 = vmatprep.subr.mxu0 0.0
    %1913 = vmatpush1.msra.mxu0 0.0
    %1914 = vmatprep.subr.mxu0 0.0
    %1915 = vmatpush1.msra.mxu0 0.0
    %1916 = vmatprep.subr.mxu0 0.0
    %1917 = vmatpush1.msra.mxu0 0.0
    %1918 = vmatprep.subr.mxu0 0.0
    %1919 = vmatpush1.msra.mxu0 0.0
    %1920 = vmatprep.subr.mxu0 0.0
    %1921 = vmatpush1.msra.mxu0 0.0
    %1922 = vmatprep.subr.mxu0 0.0
    %1923 = vmatpush1.msra.mxu0 0.0
    %1924 = vmatprep.subr.mxu0 0.0
    %1925 = vmatpush1.msra.mxu0 0.0
    %1926 = vmatprep.subr.mxu0 0.0
    %1927 = vmatpush1.msra.mxu0 0.0
    %1928 = vmatprep.subr.mxu0 0.0
    %1929 = vmatpush1.msra.mxu0 0.0
    %1930 = vmatprep.subr.mxu0 0.0
    %1931 = vmatpush1.msra.mxu0 0.0
    %1932 = vmatprep.subr.mxu0 0.0
    %1933 = vmatpush1.msra.mxu0 0.0
    %1934 = vmatprep.subr.mxu0 0.0
    %1935 = vmatpush1.msra.mxu0 0.0
    %1936 = vmatprep.subr.mxu0 0.0
    %1937 = vmatpush1.msra.mxu0 0.0
    %1938 = vmatprep.subr.mxu0 0.0
    %1939 = vmatpush1.msra.mxu0 0.0
    %1940 = vmatprep.subr.mxu0 0.0
    %1941 = vmatpush1.msra.mxu0 0.0
    %1942 = vmatprep.subr.mxu0 0.0
    %1943 = vmatpush1.msra.mxu0 0.0
    %1944 = vmatprep.subr.mxu0 0.0
    %1945 = vmatpush1.msra.mxu0 0.0
    %1946 = vmatprep.subr.mxu0 0.0
    %1947 = vmatpush1.msra.mxu0 0.0
    %1948 = vmatprep.subr.mxu0 0.0
    %1949 = vmatpush1.msra.mxu0 0.0
    %1950 = vmatprep.subr.mxu0 0.0
    %1951 = vmatpush1.msra.mxu0 0.0
    %1952 = vmatprep.subr.mxu0 0.0
    %1953 = vmatpush1.msra.mxu0 0.0
    %1954 = vmatprep.subr.mxu0 0.0
    %1955 = vmatpush1.msra.mxu0 0.0
    %1956 = vmatprep.subr.mxu0 0.0
    %1957 = vmatpush1.msra.mxu0 0.0
    %1958 = vmatprep.subr.mxu0 0.0
    %1959 = vmatpush1.msra.mxu0 0.0
    %1960 = vmatprep.subr.mxu0 0.0
    %1961 = vmatpush1.msra.mxu0 0.0
    %1962 = vmatprep.subr.mxu0 0.0
    %1963 = vmatpush1.msra.mxu0 0.0
    %1964 = vmatprep.mubr.f32.mxu0 0.0
    %1965 = vmatmul.mubr.f32.gmra.mrb[0].mxu0 %v1738
    %v1966 = vpop.f32.mrb[0].mxu0
    %v1967 = vadd.f32 %v56, %v1966
    %v1968 = vpop.f32.mrb[0].mxu0
    %1969 = vdwg.mxu0
    %v1970 = vmul.f32 %v1888, %v1967
    %v1971 = vadd.f32 %v1899, %v1970
    %v1972 = vtanh.pop %v1971
    %v1973 = vsub.f32 1.0, %v1897
    %v1974 = vmul.f32 %v1973, %v1972
    %v1975 = vmul.f32 %v1897, %v1736
    %v1976 = vadd.f32 %v1974, %v1975
    %vm1977 = vcmask 254976
    %1978 = vst.msk [vmem:[#allocation4] sm:$0x3] %vm1977, %v1976
    %v1979 = vld [vmem:[%s8] sm:$0xff]
    %v1980 = vld [vmem:[%s8 + $0x8] sm:$0xff]
    %v1981 = vld [vmem:[%s8 + $0x10] sm:$0xff]
    %v1982 = vld [vmem:[%s8 + $0x18] sm:$0xff]
    %v1983 = vld [vmem:[%s9] sm:$0x1]
    %v1985 = vlaneseq
    %v1986 = vshrl.u32 %v1985, 7
    %v1987 = vsub.s32 0, %v1986
    %v1988 = vrot.slane %v1983, %v1987
    %v1991 = vsel %vm59, %v1976, 0
    %1993 = vmatprep.subr.mxu0 0.0
    %1994 = vmatpush1.msra.mxu0 %v1979
    %1995 = vmatprep.subr.mxu0 0.0
    %1996 = vmatpush1.msra.mxu0 %v1980
    %1997 = vmatprep.subr.mxu0 0.0
    %1998 = vmatpush1.msra.mxu0 %v1981
    %1999 = vmatprep.subr.mxu0 0.0
    %2000 = vmatpush1.msra.mxu0 %v1982
    %2001 = vmatprep.subr.mxu0 0.0
    %2002 = vmatpush1.msra.mxu0 0.0
    %2003 = vmatprep.subr.mxu0 0.0
    %2004 = vmatpush1.msra.mxu0 0.0
    %2005 = vmatprep.subr.mxu0 0.0
    %2006 = vmatpush1.msra.mxu0 0.0
    %2007 = vmatprep.subr.mxu0 0.0
    %2008 = vmatpush1.msra.mxu0 0.0
    %2009 = vmatprep.subr.mxu0 0.0
    %2010 = vmatpush1.msra.mxu0 0.0
    %2011 = vmatprep.subr.mxu0 0.0
    %2012 = vmatpush1.msra.mxu0 0.0
    %2013 = vmatprep.subr.mxu0 0.0
    %2014 = vmatpush1.msra.mxu0 0.0
    %2015 = vmatprep.subr.mxu0 0.0
    %2016 = vmatpush1.msra.mxu0 0.0
    %2017 = vmatprep.subr.mxu0 0.0
    %2018 = vmatpush1.msra.mxu0 0.0
    %2019 = vmatprep.subr.mxu0 0.0
    %2020 = vmatpush1.msra.mxu0 0.0
    %2021 = vmatprep.subr.mxu0 0.0
    %2022 = vmatpush1.msra.mxu0 0.0
    %2023 = vmatprep.subr.mxu0 0.0
    %2024 = vmatpush1.msra.mxu0 0.0
    %2025 = vmatprep.subr.mxu0 0.0
    %2026 = vmatpush1.msra.mxu0 0.0
    %2027 = vmatprep.subr.mxu0 0.0
    %2028 = vmatpush1.msra.mxu0 0.0
    %2029 = vmatprep.subr.mxu0 0.0
    %2030 = vmatpush1.msra.mxu0 0.0
    %2031 = vmatprep.subr.mxu0 0.0
    %2032 = vmatpush1.msra.mxu0 0.0
    %2033 = vmatprep.subr.mxu0 0.0
    %2034 = vmatpush1.msra.mxu0 0.0
    %2035 = vmatprep.subr.mxu0 0.0
    %2036 = vmatpush1.msra.mxu0 0.0
    %2037 = vmatprep.subr.mxu0 0.0
    %2038 = vmatpush1.msra.mxu0 0.0
    %2039 = vmatprep.subr.mxu0 0.0
    %2040 = vmatpush1.msra.mxu0 0.0
    %2041 = vmatprep.subr.mxu0 0.0
    %2042 = vmatpush1.msra.mxu0 0.0
    %2043 = vmatprep.subr.mxu0 0.0
    %2044 = vmatpush1.msra.mxu0 0.0
    %2045 = vmatprep.subr.mxu0 0.0
    %2046 = vmatpush1.msra.mxu0 0.0
    %2047 = vmatprep.subr.mxu0 0.0
    %2048 = vmatpush1.msra.mxu0 0.0
    %2049 = vmatprep.subr.mxu0 0.0
    %2050 = vmatpush1.msra.mxu0 0.0
    %2051 = vmatprep.subr.mxu0 0.0
    %2052 = vmatpush1.msra.mxu0 0.0
    %2053 = vmatprep.subr.mxu0 0.0
    %2054 = vmatpush1.msra.mxu0 0.0
    %2055 = vmatprep.subr.mxu0 0.0
    %2056 = vmatpush1.msra.mxu0 0.0
    %2057 = vmatprep.mubr.f32.mxu0 0.0
    %2058 = vmatmul.mubr.f32.gmra.mrb[0].mxu0 %v1991
    %v2059 = vpop.f32.mrb[0].mxu0
    %v2060 = vadd.f32 %v1988, %v2059
    %v2061 = vpop.f32.mrb[0].mxu0
    %2062 = vdwg.mxu0
    %vm2063 = vcmask 74752
    %2064 = vst.msk [vmem:[#allocation2] sm:$0x3] %vm2063, %v2060
    // Predicated region
    $region42: #{gru_rnn_forward.1} parent=1 // pred_check
      _
    $region43: #{gru_rnn_forward.1} parent=1 // pred_check_branch
      %2066 = sbr.rel (0) target = $region45
    $region44: #{gru_rnn_forward.1} parent=1 // pred_region
      %s2068 = ssub.s32 32, 32
      %2069 = vsyncadd [#allocation3], %s2068
      %s2071 = sshll.u32 [#allocation2], 4
      %s2072 = int_to_ptr.vmem [resolvable:$true] %s2071
      %2074 = dma.vmem_to_hbm [thread:$0]  %s2072, 32, %s10, [#allocation3]
    $region45: #{gru_rnn_forward.1} parent=1 // pred_fallthru
      _
    // Predicated region
    $region46: #{gru_rnn_forward.1} parent=1 // pred_check
      _
    $region47: #{gru_rnn_forward.1} parent=1 // pred_check_branch
      %2076 = sbr.rel (0) target = $region49
    $region48: #{gru_rnn_forward.1} parent=1 // pred_region
      %s2078 = ssub.s32 32, 32
      %2079 = vsyncadd [#allocation5], %s2078
      %s2081 = sshll.u32 [#allocation4], 4
      %s2082 = int_to_ptr.vmem [resolvable:$true] %s2081
      %2084 = dma.vmem_to_hbm [thread:$0]  %s2082, 32, %s11, [#allocation5]
    $region49: #{gru_rnn_forward.1} parent=1 // pred_fallthru
      _
    // Predicated region
    $region50: #{gru_rnn_forward.1} parent=1 // pred_check
      _
    $region51: #{gru_rnn_forward.1} parent=1 // pred_check_branch
      %2086 = sbr.rel (0) target = $region53
    $region52: #{gru_rnn_forward.1} parent=1 // pred_region
      %2087 = dma.done [#allocation3], 32
    $region53: #{gru_rnn_forward.1} parent=1 // pred_fallthru
      _
    // Predicated region
    $region54: #{gru_rnn_forward.1} parent=1 // pred_check
      _
    $region55: #{gru_rnn_forward.1} parent=1 // pred_check_branch
      %2089 = sbr.rel (0) target = $region57
    $region56: #{gru_rnn_forward.1} parent=1 // pred_region
      %2090 = dma.done [#allocation5], 32
    $region57: #{gru_rnn_forward.1} parent=1 // pred_fallthru
      _
    %2091 = vsyncpa [#allocation3], 1
    %2092 = vsyncpa [#allocation5], 1

</llo_original>
